<compile_context>
chip_gen: v7x
topology: tpu7x:2x2x1
jax: 0.10.0
libtpu: 0.0.40
codegen_flags: <defaults>
</compile_context>

<pallas_src>
import functools

import jax
import jax.numpy as jnp
from jax.experimental import pallas as pl
from jax.experimental.pallas import tpu as pltpu


def _vq_kernel(z_ref, emb_ref, esqh_ref, zq_ref, idx_ref, sse_ref, cnt_ref,
               *, dist_dtype):
    """One grid step quantizes a tile of TN flattened rows.

    z_ref    : (TN, D)            encoder-output rows (f32)
    emb_ref  : (n_e, D)           codebook (same block every step)
    esqh_ref : (1, n_e)           precomputed 0.5 * ||e_j||^2
    zq_ref   : (TN, D)            quantized rows
    idx_ref  : (1, TN//128, 128)  argmin indices, lane-dense layout
    sse_ref  : (1, 1, 1)          per-tile sum of squared (z_q - z)
    cnt_ref  : (1, 1, n_e)        per-tile code counts
    """
    z = z_ref[...].astype(jnp.float32)          # (TN, D)
    emb = emb_ref[...].astype(jnp.float32)      # (n_e, D)

    # argmin_j ||z - e_j||^2 == argmin_j (0.5*||e_j||^2 - z.e_j)
    # (||z||^2 dropped: constant per row; 0.5 scale folds the "-2*" away)
    # distance matmul on the MXU's native bf16 path; e_sq/argmin math stays f32
    cross = jax.lax.dot_general(
        z.astype(dist_dtype), emb.astype(dist_dtype),
        dimension_numbers=(((1,), (1,)), ((), ())),
        preferred_element_type=jnp.float32)                          # (TN, n_e)
    d = esqh_ref[...] - cross

    idx = jnp.argmin(d, axis=1)                                      # (TN,)
    one_hot = (jax.lax.broadcasted_iota(jnp.int32, d.shape, 1)
               == idx[:, None]).astype(jnp.float32)                  # (TN, n_e)
    # TODO(synk): if XLU-bound at large n_e, replace with a staged VALU min /
    # index-select across lane-groups and reuse it for one_hot.

    # z_q = one_hot @ embedding in f32 (exact gather, matches torch semantics)
    z_q = jnp.dot(one_hot, emb, preferred_element_type=jnp.float32)

    zq_ref[...] = z_q.astype(zq_ref.dtype)
    idx_ref[...] = idx.astype(jnp.int32).reshape(idx_ref.shape)

    diff = z_q - z
    sse_ref[...] = jnp.sum(diff * diff).reshape(sse_ref.shape)
    cnt_ref[...] = jnp.sum(one_hot, axis=0).reshape(cnt_ref.shape)
    # TODO(synk): fold the sse scalar into a padded lane of the cnt block to
    # drop one tiny output stream (kept separate here for lowering safety).


def _vmem_limit_bytes():
    """~75% of physical VMEM: ~96 MiB on v5e/v6e (128 MiB), ~48 MiB on v7x (64 MiB)."""
    try:
        cap = pltpu.get_tpu_info().vmem_capacity_bytes
    except Exception:  # non-TPU trace / query failure: conservative (v7x) fallback
        cap = 64 * 1024 * 1024
    return int(min(cap * 3 // 4, 100 * 1024 * 1024))


def _pick_tile(N, tile_n):
    """Largest 128-multiple tile that divides N, keeps >= 2 grid steps (so the
    "parallel" axis can split across v7x's two TensorCores) and prefers an even
    tile count / 256-aligned tiles (v6e/v7x MXU width)."""
    n_blocks = N // 128
    max_blocks = min(max(tile_n, 128) // 128, n_blocks)
    if n_blocks >= 2:
        max_blocks = min(max_blocks, n_blocks // 2)
    max_blocks = max(max_blocks, 1)
    cands = [b for b in range(1, max_blocks + 1) if n_blocks % b == 0]
    blocks = max(cands, key=lambda b: ((n_blocks // b) % 2 == 0, b))
    return blocks * 128


@functools.partial(
    jax.jit,
    static_argnames=("beta", "tile_n", "dist_dtype", "return_min_encodings"))
def vector_quantizer_forward(z, embedding, beta=0.25, tile_n=2048,
                             dist_dtype=jnp.bfloat16,
                             return_min_encodings=True):
    """Forward pass of VectorQuantizer.

    z         : (B, C, H, W) float32 (C == e_dim), NCHW like PyTorch
    embedding : (n_e, e_dim) float32 codebook
    returns (loss, z_q[NCHW], perplexity, min_encodings, min_encoding_indices)

    dist_dtype=bfloat16 runs the nearest-code matmul on the MXU's native bf16
    path; near-tie argmins may differ from an f32 HIGHEST reference.
    """
    B, C, H, W = z.shape
    n_e, e_dim = embedding.shape
    assert C == e_dim

    # NCHW -> NHWC -> (N, e_dim)
    z_nhwc = jnp.transpose(z, (0, 2, 3, 1))
    z_flat = z_nhwc.reshape(-1, e_dim)
    N = z_flat.shape[0]
    # TODO(synk): pad N to a multiple of 128 (masking padded rows out of
    # sse/cnt) for arbitrary spatial sizes.
    assert N % 128 == 0, "B*H*W must be a multiple of 128"

    tile = _pick_tile(N, tile_n)
    num_tiles = N // tile
    rows = tile // 128

    emb_f32 = embedding.astype(jnp.float32)
    # 0.5*||e_j||^2 hoisted out of the grid (constant across steps).
    e_sq_half = 0.5 * jnp.sum(emb_f32 ** 2, axis=1).reshape(1, n_e)

    kernel = functools.partial(_vq_kernel, dist_dtype=dist_dtype)

    zq_flat, idx_tiles, sse, cnt = pl.pallas_call(
        kernel,
        out_shape=(
            jax.ShapeDtypeStruct((N, e_dim), jnp.float32),
            jax.ShapeDtypeStruct((num_tiles, rows, 128), jnp.int32),
            jax.ShapeDtypeStruct((num_tiles, 1, 1), jnp.float32),
            jax.ShapeDtypeStruct((num_tiles, 1, n_e), jnp.float32),
        ),
        grid_spec=pltpu.PrefetchScalarGridSpec(
            num_scalar_prefetch=0,
            grid=(num_tiles,),
            in_specs=[
                pl.BlockSpec((tile, e_dim), lambda i: (i, 0)),
                # TODO(synk): single-buffer these two constant-index blocks
                # (pipeline_mode=pl.Buffered(1)) when VMEM is tight (large n_e
                # on v7x).
                pl.BlockSpec((n_e, e_dim), lambda i: (0, 0)),
                pl.BlockSpec((1, n_e), lambda i: (0, 0)),
            ],
            out_specs=[
                pl.BlockSpec((tile, e_dim), lambda i: (i, 0)),
                pl.BlockSpec((1, rows, 128), lambda i: (i, 0, 0)),
                pl.BlockSpec((1, 1, 1), lambda i: (i, 0, 0)),
                pl.BlockSpec((1, 1, n_e), lambda i: (i, 0, 0)),
            ],
        ),
        compiler_params=pltpu.CompilerParams(
            dimension_semantics=("parallel",),
            vmem_limit_bytes=_vmem_limit_bytes(),
        ),
    )(z_flat, emb_f32, e_sq_half)

    # TODO(synk): for n_e >= 4096 add a codebook-block grid axis with a running
    # min/argmin so the (tile, n_e) intermediates never exceed VMEM (mandatory
    # on v7x's 64 MiB).
    # TODO(synk): forward-only; wrap with jax.custom_vjp for the
    # straight-through estimator / beta-weighted stop-gradient gradients.

    # loss forward value: mean((sg[z_q]-z)^2) + beta*mean((z_q-sg[z])^2)
    #                   = (1+beta) * mean((z_q - z)^2)
    loss = (1.0 + beta) * jnp.sum(sse) / jnp.float32(N * e_dim)

    # straight-through: forward value of z + (z_q - z).detach() is just z_q
    z_q = zq_flat.reshape(B, H, W, C).transpose(0, 3, 1, 2)  # back to NCHW

    min_idx = idx_tiles.reshape(N, 1)
    if return_min_encodings:
        # Kept out of the kernel's HBM store path; optional because at
        # production sizes this (N, n_e) f32 materialization dominates traffic.
        min_encodings = (jnp.arange(n_e, dtype=jnp.int32)[None, :]
                         == min_idx).astype(jnp.float32)
    else:
        min_encodings = None

    e_mean = jnp.sum(cnt, axis=(0, 1)) / jnp.float32(N)
    perplexity = jnp.exp(-jnp.sum(e_mean * jnp.log(e_mean + 1e-10)))

    return loss, z_q, perplexity, min_encodings, min_idx


if __name__ == "__main__":
    # module hyper-parameters (small demo shapes)
    n_e, e_dim, beta = 16, 8, 0.25
    B, H, W = 2, 16, 16          # N = B*H*W = 512 flattened rows
    C = e_dim

    key = jax.random.PRNGKey(0)
    k_z, k_emb = jax.random.split(key)

    # uniform(-1/n_e, 1/n_e), same as the nn.Embedding init in the module
    embedding = jax.random.uniform(
        k_emb, (n_e, e_dim), dtype=jnp.float32,
        minval=-1.0 / n_e, maxval=1.0 / n_e)
    z = jax.random.normal(k_z, (B, C, H, W), dtype=jnp.float32)

    # pure-JAX reference using the same bf16-operand / f32-accumulate distance
    # math the kernel uses (so near-tie argmins are compared consistently).
    z_flat = jnp.transpose(z, (0, 2, 3, 1)).reshape(-1, e_dim)
    cross_ref = jnp.matmul(z_flat.astype(jnp.bfloat16),
                           embedding.astype(jnp.bfloat16).T,
                           preferred_element_type=jnp.float32)
    d_ref = 0.5 * jnp.sum(embedding ** 2, axis=1) - cross_ref
    idx_ref = jnp.argmin(d_ref, axis=1)
    zq_ref = embedding[idx_ref].reshape(B, H, W, C).transpose(0, 3, 1, 2)
    loss_ref = (1.0 + beta) * jnp.mean((zq_ref - z) ** 2)
    enc_ref = (jnp.arange(n_e)[None, :] == idx_ref[:, None]).astype(jnp.float32)
    e_mean_ref = jnp.mean(enc_ref, axis=0)
    ppl_ref = jnp.exp(-jnp.sum(e_mean_ref * jnp.log(e_mean_ref + 1e-10)))

    # exercise both the default (auto-clamped, multi-tile) and small-tile paths
    for tn in (2048, 128):
        loss, z_q, ppl, min_enc, min_idx = jax.block_until_ready(
            vector_quantizer_forward(z, embedding, beta=beta, tile_n=tn))
        assert bool(jnp.all(min_idx[:, 0] == idx_ref)), "index mismatch"
        assert float(jnp.max(jnp.abs(z_q - zq_ref))) < 1e-5, "z_q mismatch"
        assert abs(float(loss) - float(loss_ref)) < 1e-4, "loss mismatch"
        assert abs(float(ppl) - float(ppl_ref)) < 1e-3, "perplexity mismatch"
        assert bool(jnp.all(min_enc == enc_ref)), "encodings mismatch"

    # indices-only path (skips the (N, n_e) one-hot materialization)
    loss2, _, _, enc_none, idx2 = jax.block_until_ready(
        vector_quantizer_forward(z, embedding, beta=beta,
                                 return_min_encodings=False))
    assert enc_none is None
    assert bool(jnp.all(idx2[:, 0] == idx_ref)), "index mismatch (no-enc path)"

    print("KERNEL_OK")
</pallas_src>

<mosaic_0001>
module attributes {stable_mosaic.version = 11 : i64} {
  func.func @_vq_kernel(%arg0: i32, %arg1: memref<256x8xf32, #tpu.memory_space<vmem>>, %arg2: memref<16x8xf32, #tpu.memory_space<vmem>>, %arg3: memref<1x16xf32, #tpu.memory_space<vmem>>, %arg4: memref<256x8xf32, #tpu.memory_space<vmem>>, %arg5: memref<1x2x128xi32, #tpu.memory_space<vmem>>, %arg6: memref<1x1x1xf32, #tpu.memory_space<vmem>>, %arg7: memref<1x1x16xf32, #tpu.memory_space<vmem>>) attributes {dimension_semantics = [#tpu.dimension_semantics<parallel>], iteration_bounds = array<i64: 2>, scalar_prefetch = 0 : i64, scratch_operands = 0 : i64, tpu.core_type = #tpu.core_type<tc>, window_params = [{transform_indices = @transform_0, window_bounds = array<i64: 256, 8>}, {pipeline_mode = #tpu.pipeline_mode<synchronous>, transform_indices = @transform_1, window_bounds = array<i64: 16, 8>}, {pipeline_mode = #tpu.pipeline_mode<synchronous>, transform_indices = @transform_2, window_bounds = array<i64: 1, 16>}, {transform_indices = @transform_3, window_bounds = array<i64: 256, 8>}, {transform_indices = @transform_4, window_bounds = array<i64: 1, 2, 128>}, {transform_indices = @transform_5, window_bounds = array<i64: 1, 1, 1>}, {transform_indices = @transform_6, window_bounds = array<i64: 1, 1, 16>}]} {
    %c0 = arith.constant 0 : index
    %c0_0 = arith.constant 0 : index
    %0 = vector.load %arg1[%c0, %c0_0] : memref<256x8xf32, #tpu.memory_space<vmem>>, vector<256x8xf32>
    %c0_1 = arith.constant 0 : index
    %c0_2 = arith.constant 0 : index
    %1 = vector.load %arg2[%c0_1, %c0_2] : memref<16x8xf32, #tpu.memory_space<vmem>>, vector<16x8xf32>
    %2 = arith.truncf %0 : vector<256x8xf32> to vector<256x8xbf16>
    %3 = arith.truncf %1 : vector<16x8xf32> to vector<16x8xbf16>
    %cst = arith.constant dense<0.000000e+00> : vector<256x16xf32>
    %4 = tpu.matmul %2, %3, %cst {dimension_numbers = #tpu.dot_dimension_numbers<[1], [1], [0], [0], [0, 0, 1, 0], [], []>} : vector<256x8xbf16>, vector<16x8xbf16>, vector<256x16xf32> -> vector<256x16xf32>
    %c0_3 = arith.constant 0 : index
    %c0_4 = arith.constant 0 : index
    %5 = vector.load %arg3[%c0_3, %c0_4] : memref<1x16xf32, #tpu.memory_space<vmem>>, vector<1x16xf32>
    %6 = vector.broadcast %5 : vector<1x16xf32> to vector<256x16xf32>
    %7 = arith.subf %6, %4 : vector<256x16xf32>
    %8 = tpu.reduce_index %7 {axis = 1 : i32, kind = #tpu.reduction_kind<arg_min>} : vector<256x16xf32> -> vector<256xi32>
    %9 = tpu.iota {dimensions = array<i32: 1>} : vector<256x16xi32>
    %10 = vector.shape_cast %8 : vector<256xi32> to vector<256x1xi32>
    %11 = vector.broadcast %10 : vector<256x1xi32> to vector<256x16xi32>
    %12 = arith.cmpi eq, %9, %11 : vector<256x16xi32>
    %13 = arith.extui %12 : vector<256x16xi1> to vector<256x16xi32>
    %14 = arith.sitofp %13 : vector<256x16xi32> to vector<256x16xf32>
    %cst_5 = arith.constant dense<0.000000e+00> : vector<256x8xf32>
    %15 = tpu.matmul %14, %1, %cst_5 {dimension_numbers = #tpu.dot_dimension_numbers<[1], [0], [0], [1], [0, 0, 1, 1], [], []>} : vector<256x16xf32>, vector<16x8xf32>, vector<256x8xf32> -> vector<256x8xf32>
    %c0_6 = arith.constant 0 : index
    %c0_7 = arith.constant 0 : index
    %16 = vector.load %arg4[%c0_6, %c0_7] : memref<256x8xf32, #tpu.memory_space<vmem>>, vector<256x8xf32>
    tpu.vector_store %arg4[%c0_6, %c0_7], %15 {strides = array<i32>} : memref<256x8xf32, #tpu.memory_space<vmem>>, vector<256x8xf32>,
    %17 = vector.shape_cast %8 : vector<256xi32> to vector<1x2x128xi32>
    %c0_8 = arith.constant 0 : index
    %c0_9 = arith.constant 0 : index
    %c0_10 = arith.constant 0 : index
    %18 = vector.load %arg5[%c0_8, %c0_9, %c0_10] : memref<1x2x128xi32, #tpu.memory_space<vmem>>, vector<1x2x128xi32>
    tpu.vector_store %arg5[%c0_8, %c0_9, %c0_10], %17 {strides = array<i32>} : memref<1x2x128xi32, #tpu.memory_space<vmem>>, vector<1x2x128xi32>,
    %19 = arith.subf %15, %0 : vector<256x8xf32>
    %20 = arith.mulf %19, %19 : vector<256x8xf32>
    %21 = vector.shape_cast %20 : vector<256x8xf32> to vector<1x256x8xf32>
    %cst_11 = arith.constant dense<0.000000e+00> : vector<1xf32>
    %22 = vector.multi_reduction <add>, %21, %cst_11 [1, 2] : vector<1x256x8xf32> to vector<1xf32>
    %23 = vector.shape_cast %22 : vector<1xf32> to vector<1x1x1xf32>
    %24 = vector.extract %23[0, 0, 0] : f32 from vector<1x1x1xf32>
    %25 = vector.broadcast %24 : f32 to vector<1x1x1xf32>
    %c0_12 = arith.constant 0 : index
    %c0_13 = arith.constant 0 : index
    %c0_14 = arith.constant 0 : index
    %26 = vector.load %arg6[%c0_12, %c0_13, %c0_14] : memref<1x1x1xf32, #tpu.memory_space<vmem>>, vector<1x1x1xf32>
    tpu.vector_store %arg6[%c0_12, %c0_13, %c0_14], %25 {strides = array<i32>} : memref<1x1x1xf32, #tpu.memory_space<vmem>>, vector<1x1x1xf32>,
    %cst_15 = arith.constant dense<0.000000e+00> : vector<16xf32>
    %27 = vector.multi_reduction <add>, %14, %cst_15 [0] : vector<256x16xf32> to vector<16xf32>
    %28 = vector.shape_cast %27 : vector<16xf32> to vector<1x1x16xf32>
    %c0_16 = arith.constant 0 : index
    %c0_17 = arith.constant 0 : index
    %c0_18 = arith.constant 0 : index
    %29 = vector.load %arg7[%c0_16, %c0_17, %c0_18] : memref<1x1x16xf32, #tpu.memory_space<vmem>>, vector<1x1x16xf32>
    tpu.vector_store %arg7[%c0_16, %c0_17, %c0_18], %28 {strides = array<i32>} : memref<1x1x16xf32, #tpu.memory_space<vmem>>, vector<1x1x16xf32>,
    return
  }
  func.func @transform_0(%arg0: i32) -> (i32, i32) {
    %c0_i32 = arith.constant 0 : i32
    %c0_i32_0 = arith.constant 0 : i32
    return %arg0, %c0_i32 : i32, i32
  }
  func.func @transform_1(%arg0: i32) -> (i32, i32) {
    %c0_i32 = arith.constant 0 : i32
    %c0_i32_0 = arith.constant 0 : i32
    %c0_i32_1 = arith.constant 0 : i32
    return %c0_i32, %c0_i32_0 : i32, i32
  }
  func.func @transform_2(%arg0: i32) -> (i32, i32) {
    %c0_i32 = arith.constant 0 : i32
    %c0_i32_0 = arith.constant 0 : i32
    %c0_i32_1 = arith.constant 0 : i32
    return %c0_i32, %c0_i32_0 : i32, i32
  }
  func.func @transform_3(%arg0: i32) -> (i32, i32) {
    %c0_i32 = arith.constant 0 : i32
    %c0_i32_0 = arith.constant 0 : i32
    return %arg0, %c0_i32 : i32, i32
  }
  func.func @transform_4(%arg0: i32) -> (i32, i32, i32) {
    %c0_i32 = arith.constant 0 : i32
    %c0_i32_0 = arith.constant 0 : i32
    %c0_i32_1 = arith.constant 0 : i32
    return %arg0, %c0_i32, %c0_i32_0 : i32, i32, i32
  }
  func.func @transform_5(%arg0: i32) -> (i32, i32, i32) {
    %c0_i32 = arith.constant 0 : i32
    %c0_i32_0 = arith.constant 0 : i32
    %c0_i32_1 = arith.constant 0 : i32
    return %arg0, %c0_i32, %c0_i32_0 : i32, i32, i32
  }
  func.func @transform_6(%arg0: i32) -> (i32, i32, i32) {
    %c0_i32 = arith.constant 0 : i32
    %c0_i32_0 = arith.constant 0 : i32
    %c0_i32_1 = arith.constant 0 : i32
    return %arg0, %c0_i32, %c0_i32_0 : i32, i32, i32
  }
}

</mosaic_0001>

<llo_original>
// kernel: vector_quantizer_forward.1
$region0: #{vector_quantizer_forward.1}
  #allocation0 [shape = 'u32[]', space=smem, size = 0x4, offset = 0x4, fixed_abs, tag = 'smem constant byte address 0x4 - core index']
  #allocation1 [shape = 'u32[144,128]{1,0:T(1,128)}', space=vmem, size = 0x12000, scoped, tag = 'internal scratch']
  %s0 = inlined_call_operand.vmem [shape: f32[512,8], index: 0, kind: input, shape index: {}]
  %s1 = inlined_call_operand.vmem [shape: f32[16,8], index: 1, kind: input, shape index: {}]
  %s2 = inlined_call_operand.vmem [shape: f32[1,16], index: 2, kind: input, shape index: {}]
  %s3 = inlined_call_operand.vmem [shape: f32[512,8], index: 3, kind: output, shape index: {0}]
  %s4 = inlined_call_operand.vmem [shape: s32[2,2,128], index: 4, kind: output, shape index: {1}]
  %s5 = inlined_call_operand.vmem [shape: f32[2,1,1], index: 5, kind: output, shape index: {2}]
  %s6 = inlined_call_operand.vmem [shape: f32[2,1,16], index: 6, kind: output, shape index: {3}]
  %7 = xla_tuple %s3, %s4, %s5, %s6
  %s8 = sld [smem:[#allocation0]]
  $region69: #{vector_quantizer_forward.1} parent=0
    _
  %s10 = ssub.s32 1, %s8
  %s11 = scalar_select 0, %s10, %s8
  loop: start=0, step=1, limit=4
  $region2: #{vector_quantizer_forward.1} parent=0 // loop_pre_header
    _
  $region3: #{vector_quantizer_forward.1} parent=0 // loop_header
    %s13 = sphi 0, %s17
    %p14 = scmp.ge.s32.totalorder %s13, 4
    %s23 = sphi 0, %s25
    %s26 = sphi 0, %s23
    %s27 = sphi 0, %s26
    %s43 = sphi 0, %s27
    %s47 = sphi 0, %s47
    %s49 = sphi 0, %s47
    %s50 = sphi 0, %s49
    %s64 = sphi 0, %s50
    %s68 = sphi 0, %s68
    %s70 = sphi 0, %s68
    %s71 = sphi 0, %s70
    %s85 = sphi 0, %s71
    %s91 = sphi 0, %s93
    %s94 = sphi 0, %s91
    %s95 = sphi 0, %s94
    %s111 = sphi 0, %s95
    %s117 = sphi 0, %s119
    %s120 = sphi 0, %s117
    %s121 = sphi 0, %s120
    %s137 = sphi 0, %s121
    %s143 = sphi 0, %s145
    %s146 = sphi 0, %s143
    %s147 = sphi 0, %s146
    %s163 = sphi 0, %s147
    %s169 = sphi 0, %s171
    %s172 = sphi 0, %s169
    %s173 = sphi 0, %s172
    %s189 = sphi 0, %s173
  $region4: #{vector_quantizer_forward.1} parent=0 // loop_header_branch
    %16 = sbr.rel (%p14) target = $region8
  $region5: #{vector_quantizer_forward.1} parent=0 // loop_body
    %s18 = ssub.s32 %s13, 1
    %s19 = ssub.s32 %s13, 2
    %s20 = sadd.s32 %s13, 1
    %s21 = ssub.s32 %s13, %s20
    %p22 = scmp.eq.s32.totalorder %s21, 0
    %s24 = sadd.s32 %s23, 1
    %s25 = scalar_select %p22, %s23, %s24
    %p28 = pneg %p22
    %p29 = scmp.eq.s32.totalorder %s13, 1
    %p30 = por %p28, %p29
    %p31 = scmp.ne.s32.totalorder %s23, %s26
    %p32 = scmp.eq.s32.totalorder %s13, 0
    %p33 = por %p31, %p32
    %p34 = scmp.ne.s32.totalorder %s23, %s26
    %p35 = scmp.eq.s32.totalorder %s18, 1
    %p36 = por %p34, %p35
    %p37 = scmp.ne.s32.totalorder %s26, %s27
    %p38 = scmp.eq.s32.totalorder %s18, 0
    %p39 = por %p37, %p38
    %p40 = scmp.ne.s32.totalorder %s26, %s27
    %p41 = scmp.eq.s32.totalorder %s19, 1
    %p42 = por %p40, %p41
    %p44 = scmp.ne.s32.totalorder %s27, %s43
    %p45 = scmp.eq.s32.totalorder %s19, 0
    %p46 = por %p44, %p45
    %s48 = sadd.s32 %s47, 1
    %p51 = scmp.eq.s32.totalorder %s13, 1
    %p52 = scmp.ne.s32.totalorder %s47, %s49
    %p53 = scmp.eq.s32.totalorder %s13, 0
    %p54 = por %p52, %p53
    %p55 = scmp.ne.s32.totalorder %s47, %s49
    %p56 = scmp.eq.s32.totalorder %s18, 1
    %p57 = por %p55, %p56
    %p58 = scmp.ne.s32.totalorder %s49, %s50
    %p59 = scmp.eq.s32.totalorder %s18, 0
    %p60 = por %p58, %p59
    %p61 = scmp.ne.s32.totalorder %s49, %s50
    %p62 = scmp.eq.s32.totalorder %s19, 1
    %p63 = por %p61, %p62
    %p65 = scmp.ne.s32.totalorder %s50, %s64
    %p66 = scmp.eq.s32.totalorder %s19, 0
    %p67 = por %p65, %p66
    %s69 = sadd.s32 %s68, 1
    %p72 = scmp.eq.s32.totalorder %s13, 1
    %p73 = scmp.ne.s32.totalorder %s68, %s70
    %p74 = scmp.eq.s32.totalorder %s13, 0
    %p75 = por %p73, %p74
    %p76 = scmp.ne.s32.totalorder %s68, %s70
    %p77 = scmp.eq.s32.totalorder %s18, 1
    %p78 = por %p76, %p77
    %p79 = scmp.ne.s32.totalorder %s70, %s71
    %p80 = scmp.eq.s32.totalorder %s18, 0
    %p81 = por %p79, %p80
    %p82 = scmp.ne.s32.totalorder %s70, %s71
    %p83 = scmp.eq.s32.totalorder %s19, 1
    %p84 = por %p82, %p83
    %p86 = scmp.ne.s32.totalorder %s71, %s85
    %p87 = scmp.eq.s32.totalorder %s19, 0
    %p88 = por %p86, %p87
    %s89 = ssub.s32 %s13, %s20
    %p90 = scmp.eq.s32.totalorder %s89, 0
    %s92 = sadd.s32 %s91, 1
    %s93 = scalar_select %p90, %s91, %s92
    %p96 = pneg %p90
    %p97 = scmp.eq.s32.totalorder %s13, 1
    %p98 = por %p96, %p97
    %p99 = scmp.ne.s32.totalorder %s91, %s94
    %p100 = scmp.eq.s32.totalorder %s13, 0
    %p101 = por %p99, %p100
    %p102 = scmp.ne.s32.totalorder %s91, %s94
    %p103 = scmp.eq.s32.totalorder %s18, 1
    %p104 = por %p102, %p103
    %p105 = scmp.ne.s32.totalorder %s94, %s95
    %p106 = scmp.eq.s32.totalorder %s18, 0
    %p107 = por %p105, %p106
    %p108 = scmp.ne.s32.totalorder %s94, %s95
    %p109 = scmp.eq.s32.totalorder %s19, 1
    %p110 = por %p108, %p109
    %p112 = scmp.ne.s32.totalorder %s95, %s111
    %p113 = scmp.eq.s32.totalorder %s19, 0
    %p114 = por %p112, %p113
    %s115 = ssub.s32 %s13, %s20
    %p116 = scmp.eq.s32.totalorder %s115, 0
    %s118 = sadd.s32 %s117, 1
    %s119 = scalar_select %p116, %s117, %s118
    %p122 = pneg %p116
    %p123 = scmp.eq.s32.totalorder %s13, 1
    %p124 = por %p122, %p123
    %p125 = scmp.ne.s32.totalorder %s117, %s120
    %p126 = scmp.eq.s32.totalorder %s13, 0
    %p127 = por %p125, %p126
    %p128 = scmp.ne.s32.totalorder %s117, %s120
    %p129 = scmp.eq.s32.totalorder %s18, 1
    %p130 = por %p128, %p129
    %p131 = scmp.ne.s32.totalorder %s120, %s121
    %p132 = scmp.eq.s32.totalorder %s18, 0
    %p133 = por %p131, %p132
    %p134 = scmp.ne.s32.totalorder %s120, %s121
    %p135 = scmp.eq.s32.totalorder %s19, 1
    %p136 = por %p134, %p135
    %p138 = scmp.ne.s32.totalorder %s121, %s137
    %p139 = scmp.eq.s32.totalorder %s19, 0
    %p140 = por %p138, %p139
    %s141 = ssub.s32 %s13, %s20
    %p142 = scmp.eq.s32.totalorder %s141, 0
    %s144 = sadd.s32 %s143, 1
    %s145 = scalar_select %p142, %s143, %s144
    %p148 = pneg %p142
    %p149 = scmp.eq.s32.totalorder %s13, 1
    %p150 = por %p148, %p149
    %p151 = scmp.ne.s32.totalorder %s143, %s146
    %p152 = scmp.eq.s32.totalorder %s13, 0
    %p153 = por %p151, %p152
    %p154 = scmp.ne.s32.totalorder %s143, %s146
    %p155 = scmp.eq.s32.totalorder %s18, 1
    %p156 = por %p154, %p155
    %p157 = scmp.ne.s32.totalorder %s146, %s147
    %p158 = scmp.eq.s32.totalorder %s18, 0
    %p159 = por %p157, %p158
    %p160 = scmp.ne.s32.totalorder %s146, %s147
    %p161 = scmp.eq.s32.totalorder %s19, 1
    %p162 = por %p160, %p161
    %p164 = scmp.ne.s32.totalorder %s147, %s163
    %p165 = scmp.eq.s32.totalorder %s19, 0
    %p166 = por %p164, %p165
    %s167 = ssub.s32 %s13, %s20
    %p168 = scmp.eq.s32.totalorder %s167, 0
    %s170 = sadd.s32 %s169, 1
    %s171 = scalar_select %p168, %s169, %s170
    %p174 = pneg %p168
    %p175 = scmp.eq.s32.totalorder %s13, 1
    %p176 = por %p174, %p175
    %p177 = scmp.ne.s32.totalorder %s169, %s172
    %p178 = scmp.eq.s32.totalorder %s13, 0
    %p179 = por %p177, %p178
    %p180 = scmp.ne.s32.totalorder %s169, %s172
    %p181 = scmp.eq.s32.totalorder %s18, 1
    %p182 = por %p180, %p181
    %p183 = scmp.ne.s32.totalorder %s172, %s173
    %p184 = scmp.eq.s32.totalorder %s18, 0
    %p185 = por %p183, %p184
    %p186 = scmp.ne.s32.totalorder %s172, %s173
    %p187 = scmp.eq.s32.totalorder %s19, 1
    %p188 = por %p186, %p187
    %p190 = scmp.ne.s32.totalorder %s173, %s189
    %p191 = scmp.eq.s32.totalorder %s19, 0
    %p192 = por %p190, %p191
    %p193 = scmp.le.s32.totalorder 1, %s13
    %p194 = scmp.lt.s32.totalorder %s13, 3
    %p195 = pnand %p193, %p194
    %p196 = pneg %p195
    // Predicated region
    $region9: #{vector_quantizer_forward.1} parent=5 // pred_check
      _
    $region10: #{vector_quantizer_forward.1} parent=5 // pred_check_branch
      %198 = sbr.rel (%p195) target = $region12
    $region11: #{vector_quantizer_forward.1} parent=5 // pred_region
      %s199 = ssub.s32 %s13, 1
      // Predicated region
      $region13: #{vector_quantizer_forward.1} parent=11 // pred_check
        %p200 = pneg %p60
      $region14: #{vector_quantizer_forward.1} parent=11 // pred_check_branch
        %202 = sbr.rel (%p200) target = $region16
      $region15: #{vector_quantizer_forward.1} parent=11 // pred_region
        _
      $region16: #{vector_quantizer_forward.1} parent=11 // pred_fallthru
        _
      // Predicated region
      $region17: #{vector_quantizer_forward.1} parent=11 // pred_check
        %p203 = pneg %p81
      $region18: #{vector_quantizer_forward.1} parent=11 // pred_check_branch
        %205 = sbr.rel (%p203) target = $region20
      $region19: #{vector_quantizer_forward.1} parent=11 // pred_region
        _
      $region20: #{vector_quantizer_forward.1} parent=11 // pred_fallthru
        _
    $region12: #{vector_quantizer_forward.1} parent=5 // pred_fallthru
      _
    %p206 = scmp.lt.s32.totalorder %s13, 2
    // Predicated region
    $region21: #{vector_quantizer_forward.1} parent=5 // pred_check
      %p207 = pneg %p206
    $region22: #{vector_quantizer_forward.1} parent=5 // pred_check_branch
      %209 = sbr.rel (%p207) target = $region24
    $region23: #{vector_quantizer_forward.1} parent=5 // pred_region
      // Predicated region
      $region25: #{vector_quantizer_forward.1} parent=23 // pred_check
        %p210 = pneg %p33
      $region26: #{vector_quantizer_forward.1} parent=23 // pred_check_branch
        %212 = sbr.rel (%p210) target = $region28
      $region27: #{vector_quantizer_forward.1} parent=23 // pred_region
        %s213 = smul.u32 32, %s13
        %p214 = scmp.lt.s32.totalorder %s213, 63
        %s215 = scalar_select %p214, %s213, 63
        %s216 = smul.addr %s215, 8
        %s217 = scalar_lea.vmem %s0, %s216
        %s218 = smul.u32 32, %s13
      $region28: #{vector_quantizer_forward.1} parent=23 // pred_fallthru
        _
    $region24: #{vector_quantizer_forward.1} parent=5 // pred_fallthru
      _
    %p219 = scmp.le.s32.totalorder 1, %s13
    %p220 = scmp.lt.s32.totalorder %s13, 3
    %p221 = pnand %p219, %p220
    %p222 = pneg %p221
    // Predicated region
    $region29: #{vector_quantizer_forward.1} parent=5 // pred_check
      _
    $region30: #{vector_quantizer_forward.1} parent=5 // pred_check_branch
      %224 = sbr.rel (%p221) target = $region32
    $region31: #{vector_quantizer_forward.1} parent=5 // pred_region
      %s225 = ssub.s32 %s13, 1
      %s226 = smul.u32 32, %s18
      %p227 = scmp.lt.s32.totalorder %s226, 63
      %s228 = scalar_select %p227, %s226, 63
      %s229 = smul.addr %s228, 8
      %s230 = scalar_lea.vmem %s0, %s229
      %p231 = pneg %p39
      %p232 = pneg %p36
      %p233 = pneg %p60
      %p234 = pneg %p57
      %p235 = pneg %p81
      %p236 = pneg %p78
      %p237 = pneg %p107
      %p238 = pneg %p104
      %s239 = smul.u32 32, %s18
      %p240 = scmp.lt.s32.totalorder %s239, 63
      %s241 = scalar_select %p240, %s239, 63
      %s242 = smul.addr %s241, 8
      %s243 = scalar_lea.vmem %s3, %s242
      %p244 = pneg %p133
      %p245 = pneg %p130
      %p246 = scmp.lt.s32.totalorder %s18, 1
      %s247 = scalar_select %p246, %s18, 1
      %s248 = smul.addr %s247, 2
      %s249 = scalar_lea.vmem %s4, %s248
      %p250 = pneg %p159
      %p251 = pneg %p156
      %p252 = scmp.lt.s32.totalorder %s18, 1
      %s253 = scalar_select %p252, %s18, 1
      %s254 = scalar_lea.vmem %s5, %s253
      %p255 = pneg %p185
      %p256 = pneg %p182
      %p257 = scmp.lt.s32.totalorder %s18, 1
      %s258 = scalar_select %p257, %s18, 1
      %s259 = scalar_lea.vmem %s6, %s258
      %s260 = smul.u32 32, %s18
      %p261 = scmp.lt.s32.totalorder %s260, 63
      %s262 = scalar_select %p261, %s260, 63
      %s263 = smul.addr %s262, 8
      %s264 = scalar_lea.vmem %s0, %s263
      %s265 = smul.u32 32, %s18
      %s266 = smul.u32 32, %s18
      %p267 = scmp.lt.s32.totalorder %s266, 63
      %s268 = scalar_select %p267, %s266, 63
      %s269 = smul.addr %s268, 8
      %s270 = scalar_lea.vmem %s3, %s269
      %s271 = smul.u32 32, %s18
      %p272 = scmp.lt.s32.totalorder %s18, 1
      %s273 = scalar_select %p272, %s18, 1
      %s274 = smul.addr %s273, 2
      %s275 = scalar_lea.vmem %s4, %s274
      %p276 = scmp.lt.s32.totalorder %s18, 1
      %s277 = scalar_select %p276, %s18, 1
      %s278 = scalar_lea.vmem %s5, %s277
      %p279 = scmp.lt.s32.totalorder %s18, 1
      %s280 = scalar_select %p279, %s18, 1
      %s281 = scalar_lea.vmem %s6, %s280
      %v283 = vld [vmem:[%s264] sm:$0xff]
      %v284 = vld [vmem:[%s264 + $0x8] sm:$0xff]
      %v285 = vld [vmem:[%s264 + $0x10] sm:$0xff]
      %v286 = vld [vmem:[%s264 + $0x18] sm:$0xff]
      %v287 = vld [vmem:[%s264 + $0x20] sm:$0xff]
      %v288 = vld [vmem:[%s264 + $0x28] sm:$0xff]
      %v289 = vld [vmem:[%s264 + $0x30] sm:$0xff]
      %v290 = vld [vmem:[%s264 + $0x38] sm:$0xff]
      %v291 = vld [vmem:[%s264 + $0x40] sm:$0xff]
      %v292 = vld [vmem:[%s264 + $0x48] sm:$0xff]
      %v293 = vld [vmem:[%s264 + $0x50] sm:$0xff]
      %v294 = vld [vmem:[%s264 + $0x58] sm:$0xff]
      %v295 = vld [vmem:[%s264 + $0x60] sm:$0xff]
      %v296 = vld [vmem:[%s264 + $0x68] sm:$0xff]
      %v297 = vld [vmem:[%s264 + $0x70] sm:$0xff]
      %v298 = vld [vmem:[%s264 + $0x78] sm:$0xff]
      %v299 = vld [vmem:[%s264 + $0x80] sm:$0xff]
      %v300 = vld [vmem:[%s264 + $0x88] sm:$0xff]
      %v301 = vld [vmem:[%s264 + $0x90] sm:$0xff]
      %v302 = vld [vmem:[%s264 + $0x98] sm:$0xff]
      %v303 = vld [vmem:[%s264 + $0xa0] sm:$0xff]
      %v304 = vld [vmem:[%s264 + $0xa8] sm:$0xff]
      %v305 = vld [vmem:[%s264 + $0xb0] sm:$0xff]
      %v306 = vld [vmem:[%s264 + $0xb8] sm:$0xff]
      %v307 = vld [vmem:[%s264 + $0xc0] sm:$0xff]
      %v308 = vld [vmem:[%s264 + $0xc8] sm:$0xff]
      %v309 = vld [vmem:[%s264 + $0xd0] sm:$0xff]
      %v310 = vld [vmem:[%s264 + $0xd8] sm:$0xff]
      %v311 = vld [vmem:[%s264 + $0xe0] sm:$0xff]
      %v312 = vld [vmem:[%s264 + $0xe8] sm:$0xff]
      %v313 = vld [vmem:[%s264 + $0xf0] sm:$0xff]
      %v314 = vld [vmem:[%s264 + $0xf8] sm:$0xff]
      %v315 = vld [vmem:[%s1] sm:$0xff]
      %v316 = vld [vmem:[%s1 + $0x8] sm:$0xff]
      %v317 = vpack.c.bf16 %v284, %v283
      %v318 = vpack.c.bf16 %v286, %v285
      %v319 = vpack.c.bf16 %v288, %v287
      %v320 = vpack.c.bf16 %v290, %v289
      %v321 = vpack.c.bf16 %v292, %v291
      %v322 = vpack.c.bf16 %v294, %v293
      %v323 = vpack.c.bf16 %v296, %v295
      %v324 = vpack.c.bf16 %v298, %v297
      %v325 = vpack.c.bf16 %v300, %v299
      %v326 = vpack.c.bf16 %v302, %v301
      %v327 = vpack.c.bf16 %v304, %v303
      %v328 = vpack.c.bf16 %v306, %v305
      %v329 = vpack.c.bf16 %v308, %v307
      %v330 = vpack.c.bf16 %v310, %v309
      %v331 = vpack.c.bf16 %v312, %v311
      %v332 = vpack.c.bf16 %v314, %v313
      %v333 = vpack.c.bf16 %v316, %v315
      %vm334 = vcmask 64512
      %v336 = vsel %vm334, %v317, 0
      %v339 = vsel %vm334, %v318, 0
      %v342 = vsel %vm334, %v319, 0
      %v345 = vsel %vm334, %v320, 0
      %v348 = vsel %vm334, %v321, 0
      %v351 = vsel %vm334, %v322, 0
      %v354 = vsel %vm334, %v323, 0
      %v357 = vsel %vm334, %v324, 0
      %v360 = vsel %vm334, %v325, 0
      %v363 = vsel %vm334, %v326, 0
      %v366 = vsel %vm334, %v327, 0
      %v369 = vsel %vm334, %v328, 0
      %v372 = vsel %vm334, %v329, 0
      %v375 = vsel %vm334, %v330, 0
      %v378 = vsel %vm334, %v331, 0
      %v381 = vsel %vm334, %v332, 0
      %v384 = vsel %vm334, %v333, 0
      %386 = vmatprep.subr.bf16.mxu0 0
      %387 = vmatpush1.bf16.xpose.msra.mxu0 %v384
      %388 = vmatprep.subr.bf16.mxu0 0
      %389 = vmatpush1.bf16.xpose.msra.mxu0 0
      %390 = vmatprep.subr.bf16.mxu0 0
      %391 = vmatpush1.bf16.xpose.msra.mxu0 0
      %392 = vmatprep.subr.bf16.mxu0 0
      %393 = vmatpush1.bf16.xpose.msra.mxu0 0
      %394 = vmatprep.subr.bf16.mxu0 0
      %395 = vmatpush1.bf16.xpose.msra.mxu0 0
      %396 = vmatprep.subr.bf16.mxu0 0
      %397 = vmatpush1.bf16.xpose.msra.mxu0 0
      %398 = vmatprep.subr.bf16.mxu0 0
      %399 = vmatpush1.bf16.xpose.msra.mxu0 0
      %400 = vmatprep.subr.bf16.mxu0 0
      %401 = vmatpush1.bf16.xpose.msra.mxu0 0
      %402 = vmatprep.subr.bf16.mxu0 0
      %403 = vmatpush1.bf16.xpose.msra.mxu0 0
      %404 = vmatprep.subr.bf16.mxu0 0
      %405 = vmatpush1.bf16.xpose.msra.mxu0 0
      %406 = vmatprep.subr.bf16.mxu0 0
      %407 = vmatpush1.bf16.xpose.msra.mxu0 0
      %408 = vmatprep.subr.bf16.mxu0 0
      %409 = vmatpush1.bf16.xpose.msra.mxu0 0
      %410 = vmatprep.subr.bf16.mxu0 0
      %411 = vmatpush1.bf16.xpose.msra.mxu0 0
      %412 = vmatprep.subr.bf16.mxu0 0
      %413 = vmatpush1.bf16.xpose.msra.mxu0 0
      %414 = vmatprep.subr.bf16.mxu0 0
      %415 = vmatpush1.bf16.xpose.msra.mxu0 0
      %416 = vmatprep.subr.bf16.mxu0 0
      %417 = vmatpush1.bf16.xpose.msra.mxu0 0
      %418 = vmatprep.mubr.bf16.mxu0 0
      %419 = vmatmul.mubr.bf16.gmra.mrb[0].mxu0 %v336
      %v420 = vpop.f32.mrb[0].mxu0
      %v421 = vadd.f32 0.0, %v420
      %v422 = vpop.f32.mrb[0].mxu0
      %v423 = vpop.f32.mrb[0].mxu0
      %v424 = vadd.f32 0.0, %v423
      %v425 = vpop.f32.mrb[0].mxu0
      %426 = vmatprep.mubr.bf16.mxu0 0
      %427 = vmatmul.mubr.bf16.gmra.mrb[0].mxu0 %v339
      %v428 = vpop.f32.mrb[0].mxu0
      %v429 = vadd.f32 0.0, %v428
      %v430 = vpop.f32.mrb[0].mxu0
      %v431 = vpop.f32.mrb[0].mxu0
      %v432 = vadd.f32 0.0, %v431
      %v433 = vpop.f32.mrb[0].mxu0
      %434 = vmatprep.mubr.bf16.mxu0 0
      %435 = vmatmul.mubr.bf16.gmra.mrb[0].mxu0 %v342
      %v436 = vpop.f32.mrb[0].mxu0
      %v437 = vadd.f32 0.0, %v436
      %v438 = vpop.f32.mrb[0].mxu0
      %v439 = vpop.f32.mrb[0].mxu0
      %v440 = vadd.f32 0.0, %v439
      %v441 = vpop.f32.mrb[0].mxu0
      %442 = vmatprep.mubr.bf16.mxu0 0
      %443 = vmatmul.mubr.bf16.gmra.mrb[0].mxu0 %v345
      %v444 = vpop.f32.mrb[0].mxu0
      %v445 = vadd.f32 0.0, %v444
      %v446 = vpop.f32.mrb[0].mxu0
      %v447 = vpop.f32.mrb[0].mxu0
      %v448 = vadd.f32 0.0, %v447
      %v449 = vpop.f32.mrb[0].mxu0
      %450 = vmatprep.mubr.bf16.mxu0 0
      %451 = vmatmul.mubr.bf16.gmra.mrb[0].mxu0 %v348
      %v452 = vpop.f32.mrb[0].mxu0
      %v453 = vadd.f32 0.0, %v452
      %v454 = vpop.f32.mrb[0].mxu0
      %v455 = vpop.f32.mrb[0].mxu0
      %v456 = vadd.f32 0.0, %v455
      %v457 = vpop.f32.mrb[0].mxu0
      %458 = vmatprep.mubr.bf16.mxu0 0
      %459 = vmatmul.mubr.bf16.gmra.mrb[0].mxu0 %v351
      %v460 = vpop.f32.mrb[0].mxu0
      %v461 = vadd.f32 0.0, %v460
      %v462 = vpop.f32.mrb[0].mxu0
      %v463 = vpop.f32.mrb[0].mxu0
      %v464 = vadd.f32 0.0, %v463
      %v465 = vpop.f32.mrb[0].mxu0
      %466 = vmatprep.mubr.bf16.mxu0 0
      %467 = vmatmul.mubr.bf16.gmra.mrb[0].mxu0 %v354
      %v468 = vpop.f32.mrb[0].mxu0
      %v469 = vadd.f32 0.0, %v468
      %v470 = vpop.f32.mrb[0].mxu0
      %v471 = vpop.f32.mrb[0].mxu0
      %v472 = vadd.f32 0.0, %v471
      %v473 = vpop.f32.mrb[0].mxu0
      %474 = vmatprep.mubr.bf16.mxu0 0
      %475 = vmatmul.mubr.bf16.gmra.mrb[0].mxu0 %v357
      %v476 = vpop.f32.mrb[0].mxu0
      %v477 = vadd.f32 0.0, %v476
      %v478 = vpop.f32.mrb[0].mxu0
      %v479 = vpop.f32.mrb[0].mxu0
      %v480 = vadd.f32 0.0, %v479
      %v481 = vpop.f32.mrb[0].mxu0
      %482 = vmatprep.mubr.bf16.mxu0 0
      %483 = vmatmul.mubr.bf16.gmra.mrb[0].mxu0 %v360
      %v484 = vpop.f32.mrb[0].mxu0
      %v485 = vadd.f32 0.0, %v484
      %v486 = vpop.f32.mrb[0].mxu0
      %v487 = vpop.f32.mrb[0].mxu0
      %v488 = vadd.f32 0.0, %v487
      %v489 = vpop.f32.mrb[0].mxu0
      %490 = vmatprep.mubr.bf16.mxu0 0
      %491 = vmatmul.mubr.bf16.gmra.mrb[0].mxu0 %v363
      %v492 = vpop.f32.mrb[0].mxu0
      %v493 = vadd.f32 0.0, %v492
      %v494 = vpop.f32.mrb[0].mxu0
      %v495 = vpop.f32.mrb[0].mxu0
      %v496 = vadd.f32 0.0, %v495
      %v497 = vpop.f32.mrb[0].mxu0
      %498 = vmatprep.mubr.bf16.mxu0 0
      %499 = vmatmul.mubr.bf16.gmra.mrb[0].mxu0 %v366
      %v500 = vpop.f32.mrb[0].mxu0
      %v501 = vadd.f32 0.0, %v500
      %v502 = vpop.f32.mrb[0].mxu0
      %v503 = vpop.f32.mrb[0].mxu0
      %v504 = vadd.f32 0.0, %v503
      %v505 = vpop.f32.mrb[0].mxu0
      %506 = vmatprep.mubr.bf16.mxu0 0
      %507 = vmatmul.mubr.bf16.gmra.mrb[0].mxu0 %v369
      %v508 = vpop.f32.mrb[0].mxu0
      %v509 = vadd.f32 0.0, %v508
      %v510 = vpop.f32.mrb[0].mxu0
      %v511 = vpop.f32.mrb[0].mxu0
      %v512 = vadd.f32 0.0, %v511
      %v513 = vpop.f32.mrb[0].mxu0
      %514 = vmatprep.mubr.bf16.mxu0 0
      %515 = vmatmul.mubr.bf16.gmra.mrb[0].mxu0 %v372
      %v516 = vpop.f32.mrb[0].mxu0
      %v517 = vadd.f32 0.0, %v516
      %v518 = vpop.f32.mrb[0].mxu0
      %v519 = vpop.f32.mrb[0].mxu0
      %v520 = vadd.f32 0.0, %v519
      %v521 = vpop.f32.mrb[0].mxu0
      %522 = vmatprep.mubr.bf16.mxu0 0
      %523 = vmatmul.mubr.bf16.gmra.mrb[0].mxu0 %v375
      %v524 = vpop.f32.mrb[0].mxu0
      %v525 = vadd.f32 0.0, %v524
      %v526 = vpop.f32.mrb[0].mxu0
      %v527 = vpop.f32.mrb[0].mxu0
      %v528 = vadd.f32 0.0, %v527
      %v529 = vpop.f32.mrb[0].mxu0
      %530 = vmatprep.mubr.bf16.mxu0 0
      %531 = vmatmul.mubr.bf16.gmra.mrb[0].mxu0 %v378
      %v532 = vpop.f32.mrb[0].mxu0
      %v533 = vadd.f32 0.0, %v532
      %v534 = vpop.f32.mrb[0].mxu0
      %v535 = vpop.f32.mrb[0].mxu0
      %v536 = vadd.f32 0.0, %v535
      %v537 = vpop.f32.mrb[0].mxu0
      %538 = vmatprep.mubr.bf16.mxu0 0
      %539 = vmatmul.mubr.bf16.gmra.mrb[0].mxu0 %v381
      %v540 = vpop.f32.mrb[0].mxu0
      %v541 = vadd.f32 0.0, %v540
      %v542 = vpop.f32.mrb[0].mxu0
      %v543 = vpop.f32.mrb[0].mxu0
      %v544 = vadd.f32 0.0, %v543
      %v545 = vpop.f32.mrb[0].mxu0
      %546 = vdwg.mxu0
      %v547 = vld [vmem:[%s2] sm:$0x1]
      %v549 = vlaneseq
      %v550 = vshrl.u32 %v549, 7
      %v551 = vsub.s32 0, %v550
      %v552 = vrot.slane %v547, %v551
      %v554 = vsub.f32 %v552, %v421
      %v555 = vsub.f32 %v552, %v424
      %v556 = vsub.f32 %v552, %v429
      %v557 = vsub.f32 %v552, %v432
      %v558 = vsub.f32 %v552, %v437
      %v559 = vsub.f32 %v552, %v440
      %v560 = vsub.f32 %v552, %v445
      %v561 = vsub.f32 %v552, %v448
      %v562 = vsub.f32 %v552, %v453
      %v563 = vsub.f32 %v552, %v456
      %v564 = vsub.f32 %v552, %v461
      %v565 = vsub.f32 %v552, %v464
      %v566 = vsub.f32 %v552, %v469
      %v567 = vsub.f32 %v552, %v472
      %v568 = vsub.f32 %v552, %v477
      %v569 = vsub.f32 %v552, %v480
      %v570 = vsub.f32 %v552, %v485
      %v571 = vsub.f32 %v552, %v488
      %v572 = vsub.f32 %v552, %v493
      %v573 = vsub.f32 %v552, %v496
      %v574 = vsub.f32 %v552, %v501
      %v575 = vsub.f32 %v552, %v504
      %v576 = vsub.f32 %v552, %v509
      %v577 = vsub.f32 %v552, %v512
      %v578 = vsub.f32 %v552, %v517
      %v579 = vsub.f32 %v552, %v520
      %v580 = vsub.f32 %v552, %v525
      %v581 = vsub.f32 %v552, %v528
      %v582 = vsub.f32 %v552, %v533
      %v583 = vsub.f32 %v552, %v536
      %v584 = vsub.f32 %v552, %v541
      %v585 = vsub.f32 %v552, %v544
      %vm586 = vcmask 130048
      %v587 = vsel %vm586, %v554, inf
      %588 = vmin.index.xlane.f32.xlu0 %v587
      %v589 = vpop.xlane.xlu0 %588
      %v590 = vsel %vm586, %v555, inf
      %591 = vmin.index.xlane.f32.xlu0 %v590
      %v592 = vpop.xlane.xlu0 %591
      %v593 = vsel %vm586, %v556, inf
      %594 = vmin.index.xlane.f32.xlu0 %v593
      %v595 = vpop.xlane.xlu0 %594
      %v596 = vsel %vm586, %v557, inf
      %597 = vmin.index.xlane.f32.xlu0 %v596
      %v598 = vpop.xlane.xlu0 %597
      %v599 = vsel %vm586, %v558, inf
      %600 = vmin.index.xlane.f32.xlu0 %v599
      %v601 = vpop.xlane.xlu0 %600
      %v602 = vsel %vm586, %v559, inf
      %603 = vmin.index.xlane.f32.xlu0 %v602
      %v604 = vpop.xlane.xlu0 %603
      %v605 = vsel %vm586, %v560, inf
      %606 = vmin.index.xlane.f32.xlu0 %v605
      %v607 = vpop.xlane.xlu0 %606
      %v608 = vsel %vm586, %v561, inf
      %609 = vmin.index.xlane.f32.xlu0 %v608
      %v610 = vpop.xlane.xlu0 %609
      %v611 = vsel %vm586, %v562, inf
      %612 = vmin.index.xlane.f32.xlu0 %v611
      %v613 = vpop.xlane.xlu0 %612
      %v614 = vsel %vm586, %v563, inf
      %615 = vmin.index.xlane.f32.xlu0 %v614
      %v616 = vpop.xlane.xlu0 %615
      %v617 = vsel %vm586, %v564, inf
      %618 = vmin.index.xlane.f32.xlu0 %v617
      %v619 = vpop.xlane.xlu0 %618
      %v620 = vsel %vm586, %v565, inf
      %621 = vmin.index.xlane.f32.xlu0 %v620
      %v622 = vpop.xlane.xlu0 %621
      %v623 = vsel %vm586, %v566, inf
      %624 = vmin.index.xlane.f32.xlu0 %v623
      %v625 = vpop.xlane.xlu0 %624
      %v626 = vsel %vm586, %v567, inf
      %627 = vmin.index.xlane.f32.xlu0 %v626
      %v628 = vpop.xlane.xlu0 %627
      %v629 = vsel %vm586, %v568, inf
      %630 = vmin.index.xlane.f32.xlu0 %v629
      %v631 = vpop.xlane.xlu0 %630
      %v632 = vsel %vm586, %v569, inf
      %633 = vmin.index.xlane.f32.xlu0 %v632
      %v634 = vpop.xlane.xlu0 %633
      %v635 = vsel %vm586, %v570, inf
      %636 = vmin.index.xlane.f32.xlu0 %v635
      %v637 = vpop.xlane.xlu0 %636
      %v638 = vsel %vm586, %v571, inf
      %639 = vmin.index.xlane.f32.xlu0 %v638
      %v640 = vpop.xlane.xlu0 %639
      %v641 = vsel %vm586, %v572, inf
      %642 = vmin.index.xlane.f32.xlu0 %v641
      %v643 = vpop.xlane.xlu0 %642
      %v644 = vsel %vm586, %v573, inf
      %645 = vmin.index.xlane.f32.xlu0 %v644
      %v646 = vpop.xlane.xlu0 %645
      %v647 = vsel %vm586, %v574, inf
      %648 = vmin.index.xlane.f32.xlu0 %v647
      %v649 = vpop.xlane.xlu0 %648
      %v650 = vsel %vm586, %v575, inf
      %651 = vmin.index.xlane.f32.xlu0 %v650
      %v652 = vpop.xlane.xlu0 %651
      %v653 = vsel %vm586, %v576, inf
      %654 = vmin.index.xlane.f32.xlu0 %v653
      %v655 = vpop.xlane.xlu0 %654
      %v656 = vsel %vm586, %v577, inf
      %657 = vmin.index.xlane.f32.xlu0 %v656
      %v658 = vpop.xlane.xlu0 %657
      %v659 = vsel %vm586, %v578, inf
      %660 = vmin.index.xlane.f32.xlu0 %v659
      %v661 = vpop.xlane.xlu0 %660
      %v662 = vsel %vm586, %v579, inf
      %663 = vmin.index.xlane.f32.xlu0 %v662
      %v664 = vpop.xlane.xlu0 %663
      %v665 = vsel %vm586, %v580, inf
      %666 = vmin.index.xlane.f32.xlu0 %v665
      %v667 = vpop.xlane.xlu0 %666
      %v668 = vsel %vm586, %v581, inf
      %669 = vmin.index.xlane.f32.xlu0 %v668
      %v670 = vpop.xlane.xlu0 %669
      %v671 = vsel %vm586, %v582, inf
      %672 = vmin.index.xlane.f32.xlu0 %v671
      %v673 = vpop.xlane.xlu0 %672
      %v674 = vsel %vm586, %v583, inf
      %675 = vmin.index.xlane.f32.xlu0 %v674
      %v676 = vpop.xlane.xlu0 %675
      %v677 = vsel %vm586, %v584, inf
      %678 = vmin.index.xlane.f32.xlu0 %v677
      %v679 = vpop.xlane.xlu0 %678
      %v680 = vsel %vm586, %v585, inf
      %681 = vmin.index.xlane.f32.xlu0 %v680
      %v682 = vpop.xlane.xlu0 %681
      %v683 = vlaneseq
      %v684 = vand.u32 %v683, 127
      %vm685 = vcmp.eq.s32.totalorder %v684, %v589
      %vm686 = vcmp.eq.s32.totalorder %v684, %v592
      %vm687 = vcmp.eq.s32.totalorder %v684, %v595
      %vm688 = vcmp.eq.s32.totalorder %v684, %v598
      %vm689 = vcmp.eq.s32.totalorder %v684, %v601
      %vm690 = vcmp.eq.s32.totalorder %v684, %v604
      %vm691 = vcmp.eq.s32.totalorder %v684, %v607
      %vm692 = vcmp.eq.s32.totalorder %v684, %v610
      %vm693 = vcmp.eq.s32.totalorder %v684, %v613
      %vm694 = vcmp.eq.s32.totalorder %v684, %v616
      %vm695 = vcmp.eq.s32.totalorder %v684, %v619
      %vm696 = vcmp.eq.s32.totalorder %v684, %v622
      %vm697 = vcmp.eq.s32.totalorder %v684, %v625
      %vm698 = vcmp.eq.s32.totalorder %v684, %v628
      %vm699 = vcmp.eq.s32.totalorder %v684, %v631
      %vm700 = vcmp.eq.s32.totalorder %v684, %v634
      %vm701 = vcmp.eq.s32.totalorder %v684, %v637
      %vm702 = vcmp.eq.s32.totalorder %v684, %v640
      %vm703 = vcmp.eq.s32.totalorder %v684, %v643
      %vm704 = vcmp.eq.s32.totalorder %v684, %v646
      %vm705 = vcmp.eq.s32.totalorder %v684, %v649
      %vm706 = vcmp.eq.s32.totalorder %v684, %v652
      %vm707 = vcmp.eq.s32.totalorder %v684, %v655
      %vm708 = vcmp.eq.s32.totalorder %v684, %v658
      %vm709 = vcmp.eq.s32.totalorder %v684, %v661
      %vm710 = vcmp.eq.s32.totalorder %v684, %v664
      %vm711 = vcmp.eq.s32.totalorder %v684, %v667
      %vm712 = vcmp.eq.s32.totalorder %v684, %v670
      %vm713 = vcmp.eq.s32.totalorder %v684, %v673
      %vm714 = vcmp.eq.s32.totalorder %v684, %v676
      %vm715 = vcmp.eq.s32.totalorder %v684, %v679
      %vm716 = vcmp.eq.s32.totalorder %v684, %v682
      %v717 = vsel %vm685, 1, 0
      %v718 = vsel %vm686, 1, 0
      %v719 = vsel %vm687, 1, 0
      %v720 = vsel %vm688, 1, 0
      %v721 = vsel %vm689, 1, 0
      %v722 = vsel %vm690, 1, 0
      %v723 = vsel %vm691, 1, 0
      %v724 = vsel %vm692, 1, 0
      %v725 = vsel %vm693, 1, 0
      %v726 = vsel %vm694, 1, 0
      %v727 = vsel %vm695, 1, 0
      %v728 = vsel %vm696, 1, 0
      %v729 = vsel %vm697, 1, 0
      %v730 = vsel %vm698, 1, 0
      %v731 = vsel %vm699, 1, 0
      %v732 = vsel %vm700, 1, 0
      %v733 = vsel %vm701, 1, 0
      %v734 = vsel %vm702, 1, 0
      %v735 = vsel %vm703, 1, 0
      %v736 = vsel %vm704, 1, 0
      %v737 = vsel %vm705, 1, 0
      %v738 = vsel %vm706, 1, 0
      %v739 = vsel %vm707, 1, 0
      %v740 = vsel %vm708, 1, 0
      %v741 = vsel %vm709, 1, 0
      %v742 = vsel %vm710, 1, 0
      %v743 = vsel %vm711, 1, 0
      %v744 = vsel %vm712, 1, 0
      %v745 = vsel %vm713, 1, 0
      %v746 = vsel %vm714, 1, 0
      %v747 = vsel %vm715, 1, 0
      %v748 = vsel %vm716, 1, 0
      %v749 = vcvt.s32.f32 %v717
      %v750 = vcvt.s32.f32 %v718
      %v751 = vcvt.s32.f32 %v719
      %v752 = vcvt.s32.f32 %v720
      %v753 = vcvt.s32.f32 %v721
      %v754 = vcvt.s32.f32 %v722
      %v755 = vcvt.s32.f32 %v723
      %v756 = vcvt.s32.f32 %v724
      %v757 = vcvt.s32.f32 %v725
      %v758 = vcvt.s32.f32 %v726
      %v759 = vcvt.s32.f32 %v727
      %v760 = vcvt.s32.f32 %v728
      %v761 = vcvt.s32.f32 %v729
      %v762 = vcvt.s32.f32 %v730
      %v763 = vcvt.s32.f32 %v731
      %v764 = vcvt.s32.f32 %v732
      %v765 = vcvt.s32.f32 %v733
      %v766 = vcvt.s32.f32 %v734
      %v767 = vcvt.s32.f32 %v735
      %v768 = vcvt.s32.f32 %v736
      %v769 = vcvt.s32.f32 %v737
      %v770 = vcvt.s32.f32 %v738
      %v771 = vcvt.s32.f32 %v739
      %v772 = vcvt.s32.f32 %v740
      %v773 = vcvt.s32.f32 %v741
      %v774 = vcvt.s32.f32 %v742
      %v775 = vcvt.s32.f32 %v743
      %v776 = vcvt.s32.f32 %v744
      %v777 = vcvt.s32.f32 %v745
      %v778 = vcvt.s32.f32 %v746
      %v779 = vcvt.s32.f32 %v747
      %v780 = vcvt.s32.f32 %v748
      %v782 = vsel %vm586, %v749, 0
      %v785 = vsel %vm586, %v750, 0
      %v788 = vsel %vm586, %v751, 0
      %v791 = vsel %vm586, %v752, 0
      %v794 = vsel %vm586, %v753, 0
      %v797 = vsel %vm586, %v754, 0
      %v800 = vsel %vm586, %v755, 0
      %v803 = vsel %vm586, %v756, 0
      %v806 = vsel %vm586, %v757, 0
      %v809 = vsel %vm586, %v758, 0
      %v812 = vsel %vm586, %v759, 0
      %v815 = vsel %vm586, %v760, 0
      %v818 = vsel %vm586, %v761, 0
      %v821 = vsel %vm586, %v762, 0
      %v824 = vsel %vm586, %v763, 0
      %v827 = vsel %vm586, %v764, 0
      %v830 = vsel %vm586, %v765, 0
      %v833 = vsel %vm586, %v766, 0
      %v836 = vsel %vm586, %v767, 0
      %v839 = vsel %vm586, %v768, 0
      %v842 = vsel %vm586, %v769, 0
      %v845 = vsel %vm586, %v770, 0
      %v848 = vsel %vm586, %v771, 0
      %v851 = vsel %vm586, %v772, 0
      %v854 = vsel %vm586, %v773, 0
      %v857 = vsel %vm586, %v774, 0
      %v860 = vsel %vm586, %v775, 0
      %v863 = vsel %vm586, %v776, 0
      %v866 = vsel %vm586, %v777, 0
      %v869 = vsel %vm586, %v778, 0
      %v872 = vsel %vm586, %v779, 0
      %v875 = vsel %vm586, %v780, 0
      %877 = vmatprep.subr.mxu0 0.0
      %878 = vmatpush1.msra.mxu0 %v315
      %879 = vmatprep.subr.mxu0 0.0
      %880 = vmatpush1.msra.mxu0 %v316
      %881 = vmatprep.subr.mxu0 0.0
      %882 = vmatpush1.msra.mxu0 0.0
      %883 = vmatprep.subr.mxu0 0.0
      %884 = vmatpush1.msra.mxu0 0.0
      %885 = vmatprep.subr.mxu0 0.0
      %886 = vmatpush1.msra.mxu0 0.0
      %887 = vmatprep.subr.mxu0 0.0
      %888 = vmatpush1.msra.mxu0 0.0
      %889 = vmatprep.subr.mxu0 0.0
      %890 = vmatpush1.msra.mxu0 0.0
      %891 = vmatprep.subr.mxu0 0.0
      %892 = vmatpush1.msra.mxu0 0.0
      %893 = vmatprep.subr.mxu0 0.0
      %894 = vmatpush1.msra.mxu0 0.0
      %895 = vmatprep.subr.mxu0 0.0
      %896 = vmatpush1.msra.mxu0 0.0
      %897 = vmatprep.subr.mxu0 0.0
      %898 = vmatpush1.msra.mxu0 0.0
      %899 = vmatprep.subr.mxu0 0.0
      %900 = vmatpush1.msra.mxu0 0.0
      %901 = vmatprep.subr.mxu0 0.0
      %902 = vmatpush1.msra.mxu0 0.0
      %903 = vmatprep.subr.mxu0 0.0
      %904 = vmatpush1.msra.mxu0 0.0
      %905 = vmatprep.subr.mxu0 0.0
      %906 = vmatpush1.msra.mxu0 0.0
      %907 = vmatprep.subr.mxu0 0.0
      %908 = vmatpush1.msra.mxu0 0.0
      %909 = vmatprep.subr.mxu0 0.0
      %910 = vmatpush1.msra.mxu0 0.0
      %911 = vmatprep.subr.mxu0 0.0
      %912 = vmatpush1.msra.mxu0 0.0
      %913 = vmatprep.subr.mxu0 0.0
      %914 = vmatpush1.msra.mxu0 0.0
      %915 = vmatprep.subr.mxu0 0.0
      %916 = vmatpush1.msra.mxu0 0.0
      %917 = vmatprep.subr.mxu0 0.0
      %918 = vmatpush1.msra.mxu0 0.0
      %919 = vmatprep.subr.mxu0 0.0
      %920 = vmatpush1.msra.mxu0 0.0
      %921 = vmatprep.subr.mxu0 0.0
      %922 = vmatpush1.msra.mxu0 0.0
      %923 = vmatprep.subr.mxu0 0.0
      %924 = vmatpush1.msra.mxu0 0.0
      %925 = vmatprep.subr.mxu0 0.0
      %926 = vmatpush1.msra.mxu0 0.0
      %927 = vmatprep.subr.mxu0 0.0
      %928 = vmatpush1.msra.mxu0 0.0
      %929 = vmatprep.subr.mxu0 0.0
      %930 = vmatpush1.msra.mxu0 0.0
      %931 = vmatprep.subr.mxu0 0.0
      %932 = vmatpush1.msra.mxu0 0.0
      %933 = vmatprep.subr.mxu0 0.0
      %934 = vmatpush1.msra.mxu0 0.0
      %935 = vmatprep.subr.mxu0 0.0
      %936 = vmatpush1.msra.mxu0 0.0
      %937 = vmatprep.subr.mxu0 0.0
      %938 = vmatpush1.msra.mxu0 0.0
      %939 = vmatprep.subr.mxu0 0.0
      %940 = vmatpush1.msra.mxu0 0.0
      %941 = vmatprep.mubr.f32.mxu0 0.0
      %942 = vmatmul.mubr.f32.gmra.mrb[0].mxu0 %v782
      %v943 = vpop.f32.mrb[0].mxu0
      %v944 = vadd.f32 0.0, %v943
      %v945 = vpop.f32.mrb[0].mxu0
      %946 = vmatprep.mubr.f32.mxu0 0.0
      %947 = vmatmul.mubr.f32.gmra.mrb[0].mxu0 %v785
      %v948 = vpop.f32.mrb[0].mxu0
      %v949 = vadd.f32 0.0, %v948
      %v950 = vpop.f32.mrb[0].mxu0
      %951 = vmatprep.mubr.f32.mxu0 0.0
      %952 = vmatmul.mubr.f32.gmra.mrb[0].mxu0 %v788
      %v953 = vpop.f32.mrb[0].mxu0
      %v954 = vadd.f32 0.0, %v953
      %v955 = vpop.f32.mrb[0].mxu0
      %956 = vmatprep.mubr.f32.mxu0 0.0
      %957 = vmatmul.mubr.f32.gmra.mrb[0].mxu0 %v791
      %v958 = vpop.f32.mrb[0].mxu0
      %v959 = vadd.f32 0.0, %v958
      %v960 = vpop.f32.mrb[0].mxu0
      %961 = vmatprep.mubr.f32.mxu0 0.0
      %962 = vmatmul.mubr.f32.gmra.mrb[0].mxu0 %v794
      %v963 = vpop.f32.mrb[0].mxu0
      %v964 = vadd.f32 0.0, %v963
      %v965 = vpop.f32.mrb[0].mxu0
      %966 = vmatprep.mubr.f32.mxu0 0.0
      %967 = vmatmul.mubr.f32.gmra.mrb[0].mxu0 %v797
      %v968 = vpop.f32.mrb[0].mxu0
      %v969 = vadd.f32 0.0, %v968
      %v970 = vpop.f32.mrb[0].mxu0
      %971 = vmatprep.mubr.f32.mxu0 0.0
      %972 = vmatmul.mubr.f32.gmra.mrb[0].mxu0 %v800
      %v973 = vpop.f32.mrb[0].mxu0
      %v974 = vadd.f32 0.0, %v973
      %v975 = vpop.f32.mrb[0].mxu0
      %976 = vmatprep.mubr.f32.mxu0 0.0
      %977 = vmatmul.mubr.f32.gmra.mrb[0].mxu0 %v803
      %v978 = vpop.f32.mrb[0].mxu0
      %v979 = vadd.f32 0.0, %v978
      %v980 = vpop.f32.mrb[0].mxu0
      %981 = vmatprep.mubr.f32.mxu0 0.0
      %982 = vmatmul.mubr.f32.gmra.mrb[0].mxu0 %v806
      %v983 = vpop.f32.mrb[0].mxu0
      %v984 = vadd.f32 0.0, %v983
      %v985 = vpop.f32.mrb[0].mxu0
      %986 = vmatprep.mubr.f32.mxu0 0.0
      %987 = vmatmul.mubr.f32.gmra.mrb[0].mxu0 %v809
      %v988 = vpop.f32.mrb[0].mxu0
      %v989 = vadd.f32 0.0, %v988
      %v990 = vpop.f32.mrb[0].mxu0
      %991 = vmatprep.mubr.f32.mxu0 0.0
      %992 = vmatmul.mubr.f32.gmra.mrb[0].mxu0 %v812
      %v993 = vpop.f32.mrb[0].mxu0
      %v994 = vadd.f32 0.0, %v993
      %v995 = vpop.f32.mrb[0].mxu0
      %996 = vmatprep.mubr.f32.mxu0 0.0
      %997 = vmatmul.mubr.f32.gmra.mrb[0].mxu0 %v815
      %v998 = vpop.f32.mrb[0].mxu0
      %v999 = vadd.f32 0.0, %v998
      %v1000 = vpop.f32.mrb[0].mxu0
      %1001 = vmatprep.mubr.f32.mxu0 0.0
      %1002 = vmatmul.mubr.f32.gmra.mrb[0].mxu0 %v818
      %v1003 = vpop.f32.mrb[0].mxu0
      %v1004 = vadd.f32 0.0, %v1003
      %v1005 = vpop.f32.mrb[0].mxu0
      %1006 = vmatprep.mubr.f32.mxu0 0.0
      %1007 = vmatmul.mubr.f32.gmra.mrb[0].mxu0 %v821
      %v1008 = vpop.f32.mrb[0].mxu0
      %v1009 = vadd.f32 0.0, %v1008
      %v1010 = vpop.f32.mrb[0].mxu0
      %1011 = vmatprep.mubr.f32.mxu0 0.0
      %1012 = vmatmul.mubr.f32.gmra.mrb[0].mxu0 %v824
      %v1013 = vpop.f32.mrb[0].mxu0
      %v1014 = vadd.f32 0.0, %v1013
      %v1015 = vpop.f32.mrb[0].mxu0
      %1016 = vmatprep.mubr.f32.mxu0 0.0
      %1017 = vmatmul.mubr.f32.gmra.mrb[0].mxu0 %v827
      %v1018 = vpop.f32.mrb[0].mxu0
      %v1019 = vadd.f32 0.0, %v1018
      %v1020 = vpop.f32.mrb[0].mxu0
      %1021 = vmatprep.mubr.f32.mxu0 0.0
      %1022 = vmatmul.mubr.f32.gmra.mrb[0].mxu0 %v830
      %v1023 = vpop.f32.mrb[0].mxu0
      %v1024 = vadd.f32 0.0, %v1023
      %v1025 = vpop.f32.mrb[0].mxu0
      %1026 = vmatprep.mubr.f32.mxu0 0.0
      %1027 = vmatmul.mubr.f32.gmra.mrb[0].mxu0 %v833
      %v1028 = vpop.f32.mrb[0].mxu0
      %v1029 = vadd.f32 0.0, %v1028
      %v1030 = vpop.f32.mrb[0].mxu0
      %1031 = vmatprep.mubr.f32.mxu0 0.0
      %1032 = vmatmul.mubr.f32.gmra.mrb[0].mxu0 %v836
      %v1033 = vpop.f32.mrb[0].mxu0
      %v1034 = vadd.f32 0.0, %v1033
      %v1035 = vpop.f32.mrb[0].mxu0
      %1036 = vmatprep.mubr.f32.mxu0 0.0
      %1037 = vmatmul.mubr.f32.gmra.mrb[0].mxu0 %v839
      %v1038 = vpop.f32.mrb[0].mxu0
      %v1039 = vadd.f32 0.0, %v1038
      %v1040 = vpop.f32.mrb[0].mxu0
      %1041 = vmatprep.mubr.f32.mxu0 0.0
      %1042 = vmatmul.mubr.f32.gmra.mrb[0].mxu0 %v842
      %v1043 = vpop.f32.mrb[0].mxu0
      %v1044 = vadd.f32 0.0, %v1043
      %v1045 = vpop.f32.mrb[0].mxu0
      %1046 = vmatprep.mubr.f32.mxu0 0.0
      %1047 = vmatmul.mubr.f32.gmra.mrb[0].mxu0 %v845
      %v1048 = vpop.f32.mrb[0].mxu0
      %v1049 = vadd.f32 0.0, %v1048
      %v1050 = vpop.f32.mrb[0].mxu0
      %1051 = vmatprep.mubr.f32.mxu0 0.0
      %1052 = vmatmul.mubr.f32.gmra.mrb[0].mxu0 %v848
      %v1053 = vpop.f32.mrb[0].mxu0
      %v1054 = vadd.f32 0.0, %v1053
      %v1055 = vpop.f32.mrb[0].mxu0
      %1056 = vmatprep.mubr.f32.mxu0 0.0
      %1057 = vmatmul.mubr.f32.gmra.mrb[0].mxu0 %v851
      %v1058 = vpop.f32.mrb[0].mxu0
      %v1059 = vadd.f32 0.0, %v1058
      %v1060 = vpop.f32.mrb[0].mxu0
      %1061 = vmatprep.mubr.f32.mxu0 0.0
      %1062 = vmatmul.mubr.f32.gmra.mrb[0].mxu0 %v854
      %v1063 = vpop.f32.mrb[0].mxu0
      %v1064 = vadd.f32 0.0, %v1063
      %v1065 = vpop.f32.mrb[0].mxu0
      %1066 = vmatprep.mubr.f32.mxu0 0.0
      %1067 = vmatmul.mubr.f32.gmra.mrb[0].mxu0 %v857
      %v1068 = vpop.f32.mrb[0].mxu0
      %v1069 = vadd.f32 0.0, %v1068
      %v1070 = vpop.f32.mrb[0].mxu0
      %1071 = vmatprep.mubr.f32.mxu0 0.0
      %1072 = vmatmul.mubr.f32.gmra.mrb[0].mxu0 %v860
      %v1073 = vpop.f32.mrb[0].mxu0
      %v1074 = vadd.f32 0.0, %v1073
      %v1075 = vpop.f32.mrb[0].mxu0
      %1076 = vmatprep.mubr.f32.mxu0 0.0
      %1077 = vmatmul.mubr.f32.gmra.mrb[0].mxu0 %v863
      %v1078 = vpop.f32.mrb[0].mxu0
      %v1079 = vadd.f32 0.0, %v1078
      %v1080 = vpop.f32.mrb[0].mxu0
      %1081 = vmatprep.mubr.f32.mxu0 0.0
      %1082 = vmatmul.mubr.f32.gmra.mrb[0].mxu0 %v866
      %v1083 = vpop.f32.mrb[0].mxu0
      %v1084 = vadd.f32 0.0, %v1083
      %v1085 = vpop.f32.mrb[0].mxu0
      %1086 = vmatprep.mubr.f32.mxu0 0.0
      %1087 = vmatmul.mubr.f32.gmra.mrb[0].mxu0 %v869
      %v1088 = vpop.f32.mrb[0].mxu0
      %v1089 = vadd.f32 0.0, %v1088
      %v1090 = vpop.f32.mrb[0].mxu0
      %1091 = vmatprep.mubr.f32.mxu0 0.0
      %1092 = vmatmul.mubr.f32.gmra.mrb[0].mxu0 %v872
      %v1093 = vpop.f32.mrb[0].mxu0
      %v1094 = vadd.f32 0.0, %v1093
      %v1095 = vpop.f32.mrb[0].mxu0
      %1096 = vmatprep.mubr.f32.mxu0 0.0
      %1097 = vmatmul.mubr.f32.gmra.mrb[0].mxu0 %v875
      %v1098 = vpop.f32.mrb[0].mxu0
      %v1099 = vadd.f32 0.0, %v1098
      %v1100 = vpop.f32.mrb[0].mxu0
      %1101 = vdwg.mxu0
      %1102 = vst.msk [vmem:[%s270] sm:$0xff] %vm334, %v944
      %1103 = vst.msk [vmem:[%s270 + $0x8] sm:$0xff] %vm334, %v949
      %1104 = vst.msk [vmem:[%s270 + $0x10] sm:$0xff] %vm334, %v954
      %1105 = vst.msk [vmem:[%s270 + $0x18] sm:$0xff] %vm334, %v959
      %1106 = vst.msk [vmem:[%s270 + $0x20] sm:$0xff] %vm334, %v964
      %1107 = vst.msk [vmem:[%s270 + $0x28] sm:$0xff] %vm334, %v969
      %1108 = vst.msk [vmem:[%s270 + $0x30] sm:$0xff] %vm334, %v974
      %1109 = vst.msk [vmem:[%s270 + $0x38] sm:$0xff] %vm334, %v979
      %1110 = vst.msk [vmem:[%s270 + $0x40] sm:$0xff] %vm334, %v984
      %1111 = vst.msk [vmem:[%s270 + $0x48] sm:$0xff] %vm334, %v989
      %1112 = vst.msk [vmem:[%s270 + $0x50] sm:$0xff] %vm334, %v994
      %1113 = vst.msk [vmem:[%s270 + $0x58] sm:$0xff] %vm334, %v999
      %1114 = vst.msk [vmem:[%s270 + $0x60] sm:$0xff] %vm334, %v1004
      %1115 = vst.msk [vmem:[%s270 + $0x68] sm:$0xff] %vm334, %v1009
      %1116 = vst.msk [vmem:[%s270 + $0x70] sm:$0xff] %vm334, %v1014
      %1117 = vst.msk [vmem:[%s270 + $0x78] sm:$0xff] %vm334, %v1019
      %1118 = vst.msk [vmem:[%s270 + $0x80] sm:$0xff] %vm334, %v1024
      %1119 = vst.msk [vmem:[%s270 + $0x88] sm:$0xff] %vm334, %v1029
      %1120 = vst.msk [vmem:[%s270 + $0x90] sm:$0xff] %vm334, %v1034
      %1121 = vst.msk [vmem:[%s270 + $0x98] sm:$0xff] %vm334, %v1039
      %1122 = vst.msk [vmem:[%s270 + $0xa0] sm:$0xff] %vm334, %v1044
      %1123 = vst.msk [vmem:[%s270 + $0xa8] sm:$0xff] %vm334, %v1049
      %1124 = vst.msk [vmem:[%s270 + $0xb0] sm:$0xff] %vm334, %v1054
      %1125 = vst.msk [vmem:[%s270 + $0xb8] sm:$0xff] %vm334, %v1059
      %1126 = vst.msk [vmem:[%s270 + $0xc0] sm:$0xff] %vm334, %v1064
      %1127 = vst.msk [vmem:[%s270 + $0xc8] sm:$0xff] %vm334, %v1069
      %1128 = vst.msk [vmem:[%s270 + $0xd0] sm:$0xff] %vm334, %v1074
      %1129 = vst.msk [vmem:[%s270 + $0xd8] sm:$0xff] %vm334, %v1079
      %1130 = vst.msk [vmem:[%s270 + $0xe0] sm:$0xff] %vm334, %v1084
      %1131 = vst.msk [vmem:[%s270 + $0xe8] sm:$0xff] %vm334, %v1089
      %1132 = vst.msk [vmem:[%s270 + $0xf0] sm:$0xff] %vm334, %v1094
      %1133 = vst.msk [vmem:[%s270 + $0xf8] sm:$0xff] %vm334, %v1099
      %v1134 = vlaneseq
      %v1135 = vshrl.u32 %v1134, 7
      %v1136 = vsub.s32 %v684, %v1135
      %v1137 = vrot.slane %v589, %v1136
      %v1138 = vadd.s32 %v684, 4294967288
      %v1139 = vlaneseq
      %v1140 = vshrl.u32 %v1139, 7
      %v1141 = vsub.s32 %v1138, %v1140
      %v1142 = vrot.slane %v592, %v1141
      %vm1143 = vcmask 130112
      %v1144 = vsel %vm1143, %v1142, %v1137
      %v1145 = vadd.s32 %v684, 4294967280
      %v1146 = vlaneseq
      %v1147 = vshrl.u32 %v1146, 7
      %v1148 = vsub.s32 %v1145, %v1147
      %v1149 = vrot.slane %v595, %v1148
      %vm1150 = vcmask 195712
      %v1151 = vsel %vm1150, %v1149, %v1144
      %v1152 = vadd.s32 %v684, 4294967272
      %v1153 = vlaneseq
      %v1154 = vshrl.u32 %v1153, 7
      %v1155 = vsub.s32 %v1152, %v1154
      %v1156 = vrot.slane %v598, %v1155
      %vm1157 = vcmask 261312
      %v1158 = vsel %vm1157, %v1156, %v1151
      %v1159 = vadd.s32 %v684, 4294967264
      %v1160 = vlaneseq
      %v1161 = vshrl.u32 %v1160, 7
      %v1162 = vsub.s32 %v1159, %v1161
      %v1163 = vrot.slane %v601, %v1162
      %vm1164 = vcmask 326912
      %v1165 = vsel %vm1164, %v1163, %v1158
      %v1166 = vadd.s32 %v684, 4294967256
      %v1167 = vlaneseq
      %v1168 = vshrl.u32 %v1167, 7
      %v1169 = vsub.s32 %v1166, %v1168
      %v1170 = vrot.slane %v604, %v1169
      %vm1171 = vcmask 392512
      %v1172 = vsel %vm1171, %v1170, %v1165
      %v1173 = vadd.s32 %v684, 4294967248
      %v1174 = vlaneseq
      %v1175 = vshrl.u32 %v1174, 7
      %v1176 = vsub.s32 %v1173, %v1175
      %v1177 = vrot.slane %v607, %v1176
      %vm1178 = vcmask 458112
      %v1179 = vsel %vm1178, %v1177, %v1172
      %v1180 = vadd.s32 %v684, 4294967240
      %v1181 = vlaneseq
      %v1182 = vshrl.u32 %v1181, 7
      %v1183 = vsub.s32 %v1180, %v1182
      %v1184 = vrot.slane %v610, %v1183
      %vm1185 = vcmask 523712
      %v1186 = vsel %vm1185, %v1184, %v1179
      %v1187 = vadd.s32 %v684, 4294967232
      %v1188 = vlaneseq
      %v1189 = vshrl.u32 %v1188, 7
      %v1190 = vsub.s32 %v1187, %v1189
      %v1191 = vrot.slane %v613, %v1190
      %vm1192 = vcmask 589312
      %v1193 = vsel %vm1192, %v1191, %v1186
      %v1194 = vadd.s32 %v684, 4294967224
      %v1195 = vlaneseq
      %v1196 = vshrl.u32 %v1195, 7
      %v1197 = vsub.s32 %v1194, %v1196
      %v1198 = vrot.slane %v616, %v1197
      %vm1199 = vcmask 654912
      %v1200 = vsel %vm1199, %v1198, %v1193
      %v1201 = vadd.s32 %v684, 4294967216
      %v1202 = vlaneseq
      %v1203 = vshrl.u32 %v1202, 7
      %v1204 = vsub.s32 %v1201, %v1203
      %v1205 = vrot.slane %v619, %v1204
      %vm1206 = vcmask 720512
      %v1207 = vsel %vm1206, %v1205, %v1200
      %v1208 = vadd.s32 %v684, 4294967208
      %v1209 = vlaneseq
      %v1210 = vshrl.u32 %v1209, 7
      %v1211 = vsub.s32 %v1208, %v1210
      %v1212 = vrot.slane %v622, %v1211
      %vm1213 = vcmask 786112
      %v1214 = vsel %vm1213, %v1212, %v1207
      %v1215 = vadd.s32 %v684, 4294967200
      %v1216 = vlaneseq
      %v1217 = vshrl.u32 %v1216, 7
      %v1218 = vsub.s32 %v1215, %v1217
      %v1219 = vrot.slane %v625, %v1218
      %vm1220 = vcmask 851712
      %v1221 = vsel %vm1220, %v1219, %v1214
      %v1222 = vadd.s32 %v684, 4294967192
      %v1223 = vlaneseq
      %v1224 = vshrl.u32 %v1223, 7
      %v1225 = vsub.s32 %v1222, %v1224
      %v1226 = vrot.slane %v628, %v1225
      %vm1227 = vcmask 917312
      %v1228 = vsel %vm1227, %v1226, %v1221
      %v1229 = vadd.s32 %v684, 4294967184
      %v1230 = vlaneseq
      %v1231 = vshrl.u32 %v1230, 7
      %v1232 = vsub.s32 %v1229, %v1231
      %v1233 = vrot.slane %v631, %v1232
      %vm1234 = vcmask 982912
      %v1235 = vsel %vm1234, %v1233, %v1228
      %v1236 = vadd.s32 %v684, 4294967176
      %v1237 = vlaneseq
      %v1238 = vshrl.u32 %v1237, 7
      %v1239 = vsub.s32 %v1236, %v1238
      %v1240 = vrot.slane %v634, %v1239
      %vm1241 = vcmask 1048512
      %v1242 = vsel %vm1241, %v1240, %v1235
      %1243 = vst [vmem:[%s275] ss:$2 sm:$0x1] %v1242
      %v1244 = vlaneseq
      %v1245 = vshrl.u32 %v1244, 7
      %v1246 = vsub.s32 %v684, %v1245
      %v1247 = vrot.slane %v637, %v1246
      %v1248 = vlaneseq
      %v1249 = vshrl.u32 %v1248, 7
      %v1250 = vsub.s32 %v1138, %v1249
      %v1251 = vrot.slane %v640, %v1250
      %v1252 = vsel %vm1143, %v1251, %v1247
      %v1253 = vlaneseq
      %v1254 = vshrl.u32 %v1253, 7
      %v1255 = vsub.s32 %v1145, %v1254
      %v1256 = vrot.slane %v643, %v1255
      %v1257 = vsel %vm1150, %v1256, %v1252
      %v1258 = vlaneseq
      %v1259 = vshrl.u32 %v1258, 7
      %v1260 = vsub.s32 %v1152, %v1259
      %v1261 = vrot.slane %v646, %v1260
      %v1262 = vsel %vm1157, %v1261, %v1257
      %v1263 = vlaneseq
      %v1264 = vshrl.u32 %v1263, 7
      %v1265 = vsub.s32 %v1159, %v1264
      %v1266 = vrot.slane %v649, %v1265
      %v1267 = vsel %vm1164, %v1266, %v1262
      %v1268 = vlaneseq
      %v1269 = vshrl.u32 %v1268, 7
      %v1270 = vsub.s32 %v1166, %v1269
      %v1271 = vrot.slane %v652, %v1270
      %v1272 = vsel %vm1171, %v1271, %v1267
      %v1273 = vlaneseq
      %v1274 = vshrl.u32 %v1273, 7
      %v1275 = vsub.s32 %v1173, %v1274
      %v1276 = vrot.slane %v655, %v1275
      %v1277 = vsel %vm1178, %v1276, %v1272
      %v1278 = vlaneseq
      %v1279 = vshrl.u32 %v1278, 7
      %v1280 = vsub.s32 %v1180, %v1279
      %v1281 = vrot.slane %v658, %v1280
      %v1282 = vsel %vm1185, %v1281, %v1277
      %v1283 = vlaneseq
      %v1284 = vshrl.u32 %v1283, 7
      %v1285 = vsub.s32 %v1187, %v1284
      %v1286 = vrot.slane %v661, %v1285
      %v1287 = vsel %vm1192, %v1286, %v1282
      %v1288 = vlaneseq
      %v1289 = vshrl.u32 %v1288, 7
      %v1290 = vsub.s32 %v1194, %v1289
      %v1291 = vrot.slane %v664, %v1290
      %v1292 = vsel %vm1199, %v1291, %v1287
      %v1293 = vlaneseq
      %v1294 = vshrl.u32 %v1293, 7
      %v1295 = vsub.s32 %v1201, %v1294
      %v1296 = vrot.slane %v667, %v1295
      %v1297 = vsel %vm1206, %v1296, %v1292
      %v1298 = vlaneseq
      %v1299 = vshrl.u32 %v1298, 7
      %v1300 = vsub.s32 %v1208, %v1299
      %v1301 = vrot.slane %v670, %v1300
      %v1302 = vsel %vm1213, %v1301, %v1297
      %v1303 = vlaneseq
      %v1304 = vshrl.u32 %v1303, 7
      %v1305 = vsub.s32 %v1215, %v1304
      %v1306 = vrot.slane %v673, %v1305
      %v1307 = vsel %vm1220, %v1306, %v1302
      %v1308 = vlaneseq
      %v1309 = vshrl.u32 %v1308, 7
      %v1310 = vsub.s32 %v1222, %v1309
      %v1311 = vrot.slane %v676, %v1310
      %v1312 = vsel %vm1227, %v1311, %v1307
      %v1313 = vlaneseq
      %v1314 = vshrl.u32 %v1313, 7
      %v1315 = vsub.s32 %v1229, %v1314
      %v1316 = vrot.slane %v679, %v1315
      %v1317 = vsel %vm1234, %v1316, %v1312
      %v1318 = vlaneseq
      %v1319 = vshrl.u32 %v1318, 7
      %v1320 = vsub.s32 %v1236, %v1319
      %v1321 = vrot.slane %v682, %v1320
      %v1322 = vsel %vm1241, %v1321, %v1317
      %s1323 = scalar_lea.vmem %s275, 1
      %1324 = vst [vmem:[%s1323] ss:$2 sm:$0x1] %v1322
      %v1325 = vsub.f32 %v944, %v283
      %v1326 = vsub.f32 %v949, %v284
      %v1327 = vsub.f32 %v954, %v285
      %v1328 = vsub.f32 %v959, %v286
      %v1329 = vsub.f32 %v964, %v287
      %v1330 = vsub.f32 %v969, %v288
      %v1331 = vsub.f32 %v974, %v289
      %v1332 = vsub.f32 %v979, %v290
      %v1333 = vsub.f32 %v984, %v291
      %v1334 = vsub.f32 %v989, %v292
      %v1335 = vsub.f32 %v994, %v293
      %v1336 = vsub.f32 %v999, %v294
      %v1337 = vsub.f32 %v1004, %v295
      %v1338 = vsub.f32 %v1009, %v296
      %v1339 = vsub.f32 %v1014, %v297
      %v1340 = vsub.f32 %v1019, %v298
      %v1341 = vsub.f32 %v1024, %v299
      %v1342 = vsub.f32 %v1029, %v300
      %v1343 = vsub.f32 %v1034, %v301
      %v1344 = vsub.f32 %v1039, %v302
      %v1345 = vsub.f32 %v1044, %v303
      %v1346 = vsub.f32 %v1049, %v304
      %v1347 = vsub.f32 %v1054, %v305
      %v1348 = vsub.f32 %v1059, %v306
      %v1349 = vsub.f32 %v1064, %v307
      %v1350 = vsub.f32 %v1069, %v308
      %v1351 = vsub.f32 %v1074, %v309
      %v1352 = vsub.f32 %v1079, %v310
      %v1353 = vsub.f32 %v1084, %v311
      %v1354 = vsub.f32 %v1089, %v312
      %v1355 = vsub.f32 %v1094, %v313
      %v1356 = vsub.f32 %v1099, %v314
      %v1357 = vmul.f32 %v1325, %v1325
      %v1358 = vmul.f32 %v1326, %v1326
      %v1359 = vmul.f32 %v1327, %v1327
      %v1360 = vmul.f32 %v1328, %v1328
      %v1361 = vmul.f32 %v1329, %v1329
      %v1362 = vmul.f32 %v1330, %v1330
      %v1363 = vmul.f32 %v1331, %v1331
      %v1364 = vmul.f32 %v1332, %v1332
      %v1365 = vmul.f32 %v1333, %v1333
      %v1366 = vmul.f32 %v1334, %v1334
      %v1367 = vmul.f32 %v1335, %v1335
      %v1368 = vmul.f32 %v1336, %v1336
      %v1369 = vmul.f32 %v1337, %v1337
      %v1370 = vmul.f32 %v1338, %v1338
      %v1371 = vmul.f32 %v1339, %v1339
      %v1372 = vmul.f32 %v1340, %v1340
      %v1373 = vmul.f32 %v1341, %v1341
      %v1374 = vmul.f32 %v1342, %v1342
      %v1375 = vmul.f32 %v1343, %v1343
      %v1376 = vmul.f32 %v1344, %v1344
      %v1377 = vmul.f32 %v1345, %v1345
      %v1378 = vmul.f32 %v1346, %v1346
      %v1379 = vmul.f32 %v1347, %v1347
      %v1380 = vmul.f32 %v1348, %v1348
      %v1381 = vmul.f32 %v1349, %v1349
      %v1382 = vmul.f32 %v1350, %v1350
      %v1383 = vmul.f32 %v1351, %v1351
      %v1384 = vmul.f32 %v1352, %v1352
      %v1385 = vmul.f32 %v1353, %v1353
      %v1386 = vmul.f32 %v1354, %v1354
      %v1387 = vmul.f32 %v1355, %v1355
      %v1388 = vmul.f32 %v1356, %v1356
      %v1389 = vsel %vm334, %v1357, 0.0
      %v1390 = vsel %vm334, %v1358, 0.0
      %v1391 = vadd.f32 %v1389, %v1390
      %v1392 = vsel %vm334, %v1359, 0.0
      %v1393 = vadd.f32 %v1391, %v1392
      %v1394 = vsel %vm334, %v1360, 0.0
      %v1395 = vadd.f32 %v1393, %v1394
      %v1396 = vsel %vm334, %v1361, 0.0
      %v1397 = vadd.f32 %v1395, %v1396
      %v1398 = vsel %vm334, %v1362, 0.0
      %v1399 = vadd.f32 %v1397, %v1398
      %v1400 = vsel %vm334, %v1363, 0.0
      %v1401 = vadd.f32 %v1399, %v1400
      %v1402 = vsel %vm334, %v1364, 0.0
      %v1403 = vadd.f32 %v1401, %v1402
      %v1404 = vsel %vm334, %v1365, 0.0
      %v1405 = vadd.f32 %v1403, %v1404
      %v1406 = vsel %vm334, %v1366, 0.0
      %v1407 = vadd.f32 %v1405, %v1406
      %v1408 = vsel %vm334, %v1367, 0.0
      %v1409 = vadd.f32 %v1407, %v1408
      %v1410 = vsel %vm334, %v1368, 0.0
      %v1411 = vadd.f32 %v1409, %v1410
      %v1412 = vsel %vm334, %v1369, 0.0
      %v1413 = vadd.f32 %v1411, %v1412
      %v1414 = vsel %vm334, %v1370, 0.0
      %v1415 = vadd.f32 %v1413, %v1414
      %v1416 = vsel %vm334, %v1371, 0.0
      %v1417 = vadd.f32 %v1415, %v1416
      %v1418 = vsel %vm334, %v1372, 0.0
      %v1419 = vadd.f32 %v1417, %v1418
      %v1420 = vsel %vm334, %v1373, 0.0
      %v1421 = vadd.f32 %v1419, %v1420
      %v1422 = vsel %vm334, %v1374, 0.0
      %v1423 = vadd.f32 %v1421, %v1422
      %v1424 = vsel %vm334, %v1375, 0.0
      %v1425 = vadd.f32 %v1423, %v1424
      %v1426 = vsel %vm334, %v1376, 0.0
      %v1427 = vadd.f32 %v1425, %v1426
      %v1428 = vsel %vm334, %v1377, 0.0
      %v1429 = vadd.f32 %v1427, %v1428
      %v1430 = vsel %vm334, %v1378, 0.0
      %v1431 = vadd.f32 %v1429, %v1430
      %v1432 = vsel %vm334, %v1379, 0.0
      %v1433 = vadd.f32 %v1431, %v1432
      %v1434 = vsel %vm334, %v1380, 0.0
      %v1435 = vadd.f32 %v1433, %v1434
      %v1436 = vsel %vm334, %v1381, 0.0
      %v1437 = vadd.f32 %v1435, %v1436
      %v1438 = vsel %vm334, %v1382, 0.0
      %v1439 = vadd.f32 %v1437, %v1438
      %v1440 = vsel %vm334, %v1383, 0.0
      %v1441 = vadd.f32 %v1439, %v1440
      %v1442 = vsel %vm334, %v1384, 0.0
      %v1443 = vadd.f32 %v1441, %v1442
      %v1444 = vsel %vm334, %v1385, 0.0
      %v1445 = vadd.f32 %v1443, %v1444
      %v1446 = vsel %vm334, %v1386, 0.0
      %v1447 = vadd.f32 %v1445, %v1446
      %v1448 = vsel %vm334, %v1387, 0.0
      %v1449 = vadd.f32 %v1447, %v1448
      %v1450 = vsel %vm334, %v1388, 0.0
      %v1451 = vadd.f32 %v1449, %v1450
      %1452 = vadd.xlane.f32.xlu0 %v1451
      %v1453 = vpop.xlane.xlu0 %1452
      %v1454 = vrot.slane %v1453, 4
      %v1455 = vadd.f32 %v1453, %v1454
      %v1456 = vrot.slane %v1455, 2
      %v1457 = vadd.f32 %v1455, %v1456
      %v1458 = vrot.slane %v1457, 1
      %v1459 = vadd.f32 %v1457, %v1458
      %s1460 = vtos %v1459
      %v1461 = vstv %s1460
      %vm1462 = vcmask 0
      %1463 = vst.msk [vmem:[%s278] sm:$0x1] %vm1462, %v1461
      %v1464 = vsel %vm586, %v749, 0.0
      %v1465 = vsel %vm586, %v750, 0.0
      %v1466 = vadd.f32 %v1464, %v1465
      %v1467 = vsel %vm586, %v751, 0.0
      %v1468 = vadd.f32 %v1466, %v1467
      %v1469 = vsel %vm586, %v752, 0.0
      %v1470 = vadd.f32 %v1468, %v1469
      %v1471 = vsel %vm586, %v753, 0.0
      %v1472 = vadd.f32 %v1470, %v1471
      %v1473 = vsel %vm586, %v754, 0.0
      %v1474 = vadd.f32 %v1472, %v1473
      %v1475 = vsel %vm586, %v755, 0.0
      %v1476 = vadd.f32 %v1474, %v1475
      %v1477 = vsel %vm586, %v756, 0.0
      %v1478 = vadd.f32 %v1476, %v1477
      %v1479 = vsel %vm586, %v757, 0.0
      %v1480 = vadd.f32 %v1478, %v1479
      %v1481 = vsel %vm586, %v758, 0.0
      %v1482 = vadd.f32 %v1480, %v1481
      %v1483 = vsel %vm586, %v759, 0.0
      %v1484 = vadd.f32 %v1482, %v1483
      %v1485 = vsel %vm586, %v760, 0.0
      %v1486 = vadd.f32 %v1484, %v1485
      %v1487 = vsel %vm586, %v761, 0.0
      %v1488 = vadd.f32 %v1486, %v1487
      %v1489 = vsel %vm586, %v762, 0.0
      %v1490 = vadd.f32 %v1488, %v1489
      %v1491 = vsel %vm586, %v763, 0.0
      %v1492 = vadd.f32 %v1490, %v1491
      %v1493 = vsel %vm586, %v764, 0.0
      %v1494 = vadd.f32 %v1492, %v1493
      %v1495 = vsel %vm586, %v765, 0.0
      %v1496 = vadd.f32 %v1494, %v1495
      %v1497 = vsel %vm586, %v766, 0.0
      %v1498 = vadd.f32 %v1496, %v1497
      %v1499 = vsel %vm586, %v767, 0.0
      %v1500 = vadd.f32 %v1498, %v1499
      %v1501 = vsel %vm586, %v768, 0.0
      %v1502 = vadd.f32 %v1500, %v1501
      %v1503 = vsel %vm586, %v769, 0.0
      %v1504 = vadd.f32 %v1502, %v1503
      %v1505 = vsel %vm586, %v770, 0.0
      %v1506 = vadd.f32 %v1504, %v1505
      %v1507 = vsel %vm586, %v771, 0.0
      %v1508 = vadd.f32 %v1506, %v1507
      %v1509 = vsel %vm586, %v772, 0.0
      %v1510 = vadd.f32 %v1508, %v1509
      %v1511 = vsel %vm586, %v773, 0.0
      %v1512 = vadd.f32 %v1510, %v1511
      %v1513 = vsel %vm586, %v774, 0.0
      %v1514 = vadd.f32 %v1512, %v1513
      %v1515 = vsel %vm586, %v775, 0.0
      %v1516 = vadd.f32 %v1514, %v1515
      %v1517 = vsel %vm586, %v776, 0.0
      %v1518 = vadd.f32 %v1516, %v1517
      %v1519 = vsel %vm586, %v777, 0.0
      %v1520 = vadd.f32 %v1518, %v1519
      %v1521 = vsel %vm586, %v778, 0.0
      %v1522 = vadd.f32 %v1520, %v1521
      %v1523 = vsel %vm586, %v779, 0.0
      %v1524 = vadd.f32 %v1522, %v1523
      %v1525 = vsel %vm586, %v780, 0.0
      %v1526 = vadd.f32 %v1524, %v1525
      %v1527 = vrot.slane %v1526, 4
      %v1528 = vadd.f32 %v1526, %v1527
      %v1529 = vrot.slane %v1528, 2
      %v1530 = vadd.f32 %v1528, %v1529
      %v1531 = vrot.slane %v1530, 1
      %v1532 = vadd.f32 %v1530, %v1531
      %vm1533 = vcmask 122880
      %1534 = vst.msk [vmem:[%s281] sm:$0x1] %vm1533, %v1532
      %s1535 = smul.u32 32, %s18
      %p1536 = scmp.lt.s32.totalorder %s1535, 63
      %s1537 = scalar_select %p1536, %s1535, 63
      %s1538 = smul.addr %s1537, 8
      %s1539 = scalar_lea.vmem %s3, %s1538
      %p1540 = scmp.lt.s32.totalorder %s18, 1
      %s1541 = scalar_select %p1540, %s18, 1
      %s1542 = smul.addr %s1541, 2
      %s1543 = scalar_lea.vmem %s4, %s1542
      %p1544 = scmp.lt.s32.totalorder %s18, 1
      %s1545 = scalar_select %p1544, %s18, 1
      %s1546 = scalar_lea.vmem %s5, %s1545
      %p1547 = scmp.lt.s32.totalorder %s18, 1
      %s1548 = scalar_select %p1547, %s18, 1
      %s1549 = scalar_lea.vmem %s6, %s1548
      // Predicated region
      $region33: #{vector_quantizer_forward.1} parent=31 // pred_check
        %p1550 = pneg %p104
      $region34: #{vector_quantizer_forward.1} parent=31 // pred_check_branch
        %1552 = sbr.rel (%p1550) target = $region36
      $region35: #{vector_quantizer_forward.1} parent=31 // pred_region
        %s1553 = smul.u32 32, %s18
      $region36: #{vector_quantizer_forward.1} parent=31 // pred_fallthru
        _
      // Predicated region
      $region37: #{vector_quantizer_forward.1} parent=31 // pred_check
        %p1554 = pneg %p130
      $region38: #{vector_quantizer_forward.1} parent=31 // pred_check_branch
        %1556 = sbr.rel (%p1554) target = $region40
      $region39: #{vector_quantizer_forward.1} parent=31 // pred_region
        _
      $region40: #{vector_quantizer_forward.1} parent=31 // pred_fallthru
        _
      // Predicated region
      $region41: #{vector_quantizer_forward.1} parent=31 // pred_check
        %p1557 = pneg %p156
      $region42: #{vector_quantizer_forward.1} parent=31 // pred_check_branch
        %1559 = sbr.rel (%p1557) target = $region44
      $region43: #{vector_quantizer_forward.1} parent=31 // pred_region
        _
      $region44: #{vector_quantizer_forward.1} parent=31 // pred_fallthru
        _
      // Predicated region
      $region45: #{vector_quantizer_forward.1} parent=31 // pred_check
        %p1560 = pneg %p182
      $region46: #{vector_quantizer_forward.1} parent=31 // pred_check_branch
        %1562 = sbr.rel (%p1560) target = $region48
      $region47: #{vector_quantizer_forward.1} parent=31 // pred_region
        _
      $region48: #{vector_quantizer_forward.1} parent=31 // pred_fallthru
        _
    $region32: #{vector_quantizer_forward.1} parent=5 // pred_fallthru
      _
    %p1563 = scmp.le.s32.totalorder 2, %s13
    // Predicated region
    $region49: #{vector_quantizer_forward.1} parent=5 // pred_check
      %p1564 = pneg %p1563
    $region50: #{vector_quantizer_forward.1} parent=5 // pred_check_branch
      %1566 = sbr.rel (%p1564) target = $region52
    $region51: #{vector_quantizer_forward.1} parent=5 // pred_region
      %s1567 = ssub.s32 %s13, 2
      // Predicated region
      $region53: #{vector_quantizer_forward.1} parent=51 // pred_check
        %p1568 = pneg %p110
      $region54: #{vector_quantizer_forward.1} parent=51 // pred_check_branch
        %1570 = sbr.rel (%p1568) target = $region56
      $region55: #{vector_quantizer_forward.1} parent=51 // pred_region
        %s1571 = smul.u32 32, %s19
        %p1572 = scmp.lt.s32.totalorder %s1571, 63
        %s1573 = scalar_select %p1572, %s1571, 63
        %s1574 = smul.addr %s1573, 8
        %s1575 = scalar_lea.vmem %s3, %s1574
      $region56: #{vector_quantizer_forward.1} parent=51 // pred_fallthru
        _
      // Predicated region
      $region57: #{vector_quantizer_forward.1} parent=51 // pred_check
        %p1576 = pneg %p136
      $region58: #{vector_quantizer_forward.1} parent=51 // pred_check_branch
        %1578 = sbr.rel (%p1576) target = $region60
      $region59: #{vector_quantizer_forward.1} parent=51 // pred_region
        %p1579 = scmp.lt.s32.totalorder %s19, 1
        %s1580 = scalar_select %p1579, %s19, 1
        %s1581 = smul.addr %s1580, 2
        %s1582 = scalar_lea.vmem %s4, %s1581
      $region60: #{vector_quantizer_forward.1} parent=51 // pred_fallthru
        _
      // Predicated region
      $region61: #{vector_quantizer_forward.1} parent=51 // pred_check
        %p1583 = pneg %p162
      $region62: #{vector_quantizer_forward.1} parent=51 // pred_check_branch
        %1585 = sbr.rel (%p1583) target = $region64
      $region63: #{vector_quantizer_forward.1} parent=51 // pred_region
        %p1586 = scmp.lt.s32.totalorder %s19, 1
        %s1587 = scalar_select %p1586, %s19, 1
        %s1588 = scalar_lea.vmem %s5, %s1587
      $region64: #{vector_quantizer_forward.1} parent=51 // pred_fallthru
        _
      // Predicated region
      $region65: #{vector_quantizer_forward.1} parent=51 // pred_check
        %p1589 = pneg %p188
      $region66: #{vector_quantizer_forward.1} parent=51 // pred_check_branch
        %1591 = sbr.rel (%p1589) target = $region68
      $region67: #{vector_quantizer_forward.1} parent=51 // pred_region
        %p1592 = scmp.lt.s32.totalorder %s19, 1
        %s1593 = scalar_select %p1592, %s19, 1
        %s1594 = scalar_lea.vmem %s6, %s1593
      $region68: #{vector_quantizer_forward.1} parent=51 // pred_fallthru
        _
    $region52: #{vector_quantizer_forward.1} parent=5 // pred_fallthru
      _
  $region6: #{vector_quantizer_forward.1} parent=0 // loop_footer
    %s17 = sadd.s32 1, %s13
  $region7: #{vector_quantizer_forward.1} parent=0 // loop_footer_branch
    %12 = sbr.rel target = $region3
  $region8: #{vector_quantizer_forward.1} parent=0 // loop_exit
    _

</llo_original>
